<compile_context>
chip_gen: v6e
topology: v6e:2x2x1
jax: 0.10.0
libtpu: 0.0.40
codegen_flags: <defaults>
</compile_context>

<pallas_src>
import jax
import jax.numpy as jnp
from jax.experimental import pallas as pl
from jax.experimental.pallas import tpu as pltpu

NUM_ENC = 256                # num_encoding_functions
HALF = NUM_ENC // 2          # 128
INPUT_DIM = 3
EMBED = INPUT_DIM + NUM_ENC  # 259

# ---- shared-range-reduction sin/cos (f32, VPU) ------------------------------
_TWO_OVER_PI = 0.6366197723675814
# pi/2 split in three parts (2x the cephes pi/4 split). k*_PIO2_1 is exact for
# |k| up to ~2**16, so the reduction stays accurate for |proj| ~ O(100) here.
_PIO2_1 = 1.5703125
_PIO2_2 = 4.837512969970703125e-4
_PIO2_3 = 7.54978995489188216e-8
_S1, _S2, _S3 = -1.6666654611e-1, 8.3321608736e-3, -1.9515295891e-4
_C1, _C2, _C3 = 4.166664568298827e-2, -1.388731625493765e-3, 2.443315711809948e-5


def _sincos(x):
    """Return (sin(x), cos(x)) sharing a single Cody-Waite range reduction."""
    kf = jnp.floor(x * _TWO_OVER_PI + 0.5)        # x = k*(pi/2) + r
    r = x - kf * _PIO2_1
    r = r - kf * _PIO2_2
    r = r - kf * _PIO2_3                          # r in ~[-pi/4, pi/4]
    z = r * r
    sin_r = r + r * z * (_S1 + z * (_S2 + z * _S3))
    cos_r = 1.0 - 0.5 * z + z * z * (_C1 + z * (_C2 + z * _C3))
    q = kf.astype(jnp.int32) & 3                  # quadrant = k mod 4
    swap = (q & 1) == 1
    s = jnp.where(swap, cos_r, sin_r)
    c = jnp.where(swap, sin_r, cos_r)
    sin_x = jnp.where(q >= 2, -s, s)
    cos_x = jnp.where((q == 1) | (q == 2), -c, c)
    return sin_x, cos_x


def _ffpe_kernel(x_ref, wt_ref, o_ref):
    # x_ref : (tm, INPUT_DIM)   VMEM
    # wt_ref: (INPUT_DIM, HALF) VMEM (gaussian_weights transposed; block index is
    #         constant across the grid so it stays resident, no per-step re-DMA)
    # o_ref : (tm, EMBED)       VMEM
    x = x_ref[...]
    proj = jnp.dot(x, wt_ref[...], preferred_element_type=jnp.float32)  # MXU
    sin_p, cos_p = _sincos(proj)                                        # VPU
    o_ref[:, 0:INPUT_DIM] = x.astype(o_ref.dtype)
    o_ref[:, INPUT_DIM:INPUT_DIM + HALF] = sin_p.astype(o_ref.dtype)
    o_ref[:, INPUT_DIM + HALF:EMBED] = cos_p.astype(o_ref.dtype)


def _round_up(v, m):
    return ((v + m - 1) // m) * m


def ff_positional_encoding(x, gaussian_weights, *, tm=2048):
    """x: (..., INPUT_DIM) float32; gaussian_weights: (HALF, INPUT_DIM)."""
    orig_shape = x.shape
    assert orig_shape[-1] == INPUT_DIM
    x2 = x.reshape(-1, INPUT_DIM)
    n = x2.shape[0]

    # Row tile: large by default (HBM-write dominated kernel), multiple of 8
    # sublanes, clamped so tiny inputs use a single block. The ragged last block
    # is handled by Pallas' masked writeback: no input pad, no output slice.
    tm_eff = min(_round_up(tm, 8), _round_up(n, 8))
    grid = pl.cdiv(n, tm_eff)

    wt = gaussian_weights.T  # (INPUT_DIM, HALF)

    cost = pl.CostEstimate(
        flops=int(n) * (2 * INPUT_DIM * HALF + 30 * NUM_ENC),
        transcendentals=int(n) * NUM_ENC,
        bytes_accessed=int(n) * (INPUT_DIM * 4 + EMBED * 4) + INPUT_DIM * HALF * 4,
    )

    out = pl.pallas_call(
        _ffpe_kernel,
        out_shape=jax.ShapeDtypeStruct((n, EMBED), x.dtype),
        grid_spec=pltpu.PrefetchScalarGridSpec(
            num_scalar_prefetch=0,
            grid=(grid,),
            in_specs=[
                pl.BlockSpec((tm_eff, INPUT_DIM), lambda i: (i, 0)),
                pl.BlockSpec((INPUT_DIM, HALF), lambda i: (0, 0)),
            ],
            out_specs=pl.BlockSpec((tm_eff, EMBED), lambda i: (i, 0)),
        ),
        compiler_params=pltpu.CompilerParams(
            dimension_semantics=("parallel",),
            vmem_limit_bytes=40 * 1024 * 1024,
        ),
        cost_estimate=cost,
    )(x2, wt)

    return out.reshape(*orig_shape[:-1], EMBED)


def ff_positional_encoding_ref(x, gaussian_weights):
    proj = jnp.matmul(x, gaussian_weights.T)
    return jnp.concatenate([x, jnp.sin(proj), jnp.cos(proj)], axis=-1)


if __name__ == "__main__":
    key = jax.random.PRNGKey(0)
    k_w, k_x = jax.random.split(key)

    gaussian_variance = 25.0
    # Deterministic init matching the module: variance * randn(HALF, INPUT_DIM)
    gaussian_weights = gaussian_variance * jax.random.normal(
        k_w, (HALF, INPUT_DIM), dtype=jnp.float32)

    # Small example input: batch=2, 128 points, 3 coords (e.g. xyz samples).
    x = jax.random.uniform(k_x, (2, 128, INPUT_DIM), dtype=jnp.float32,
                           minval=-1.0, maxval=1.0)
    out = jax.block_until_ready(ff_positional_encoding(x, gaussian_weights))
    ref = ff_positional_encoding_ref(x, gaussian_weights)
    assert out.shape == (2, 128, EMBED), out.shape
    assert jnp.allclose(out, ref, atol=1e-4, rtol=1e-4), (
        float(jnp.max(jnp.abs(out - ref))))

    # Ragged row count + multi-step grid: exercises the masked last tile
    # (no pad, no post-kernel slice).
    x2 = jax.random.uniform(k_x, (3, 70, INPUT_DIM), dtype=jnp.float32,
                            minval=-1.0, maxval=1.0)
    out2 = jax.block_until_ready(
        ff_positional_encoding(x2, gaussian_weights, tm=128))
    ref2 = ff_positional_encoding_ref(x2, gaussian_weights)
    assert out2.shape == (3, 70, EMBED), out2.shape
    assert jnp.allclose(out2, ref2, atol=1e-4, rtol=1e-4), (
        float(jnp.max(jnp.abs(out2 - ref2))))

    print("KERNEL_OK")
</pallas_src>

<mosaic_0001>
module attributes {stable_mosaic.version = 11 : i64} {
  func.func @_ffpe_kernel(%arg0: i32, %arg1: memref<256x3xf32, #tpu.memory_space<vmem>>, %arg2: memref<3x128xf32, #tpu.memory_space<vmem>>, %arg3: memref<256x259xf32, #tpu.memory_space<vmem>>) attributes {dimension_semantics = [#tpu.dimension_semantics<parallel>], iteration_bounds = array<i64: 1>, scalar_prefetch = 0 : i64, scratch_operands = 0 : i64, tpu.core_type = #tpu.core_type<tc>, window_params = [{transform_indices = @transform_0, window_bounds = array<i64: 256, 3>}, {pipeline_mode = #tpu.pipeline_mode<synchronous>, transform_indices = @transform_1, window_bounds = array<i64: 3, 128>}, {transform_indices = @transform_2, window_bounds = array<i64: 256, 259>}]} {
    %c0 = arith.constant 0 : index
    %c0_0 = arith.constant 0 : index
    %0 = vector.load %arg1[%c0, %c0_0] : memref<256x3xf32, #tpu.memory_space<vmem>>, vector<256x3xf32>
    %c0_1 = arith.constant 0 : index
    %c0_2 = arith.constant 0 : index
    %1 = vector.load %arg2[%c0_1, %c0_2] : memref<3x128xf32, #tpu.memory_space<vmem>>, vector<3x128xf32>
    %cst = arith.constant dense<0.000000e+00> : vector<256x128xf32>
    %2 = tpu.matmul %0, %1, %cst {dimension_numbers = #tpu.dot_dimension_numbers<[1], [0], [0], [1], [0, 0, 1, 1], [], []>} : vector<256x3xf32>, vector<3x128xf32>, vector<256x128xf32> -> vector<256x128xf32>
    %cst_3 = arith.constant 0.636619746 : f32
    %3 = vector.broadcast %cst_3 : f32 to vector<256x128xf32>
    %4 = arith.mulf %2, %3 : vector<256x128xf32>
    %cst_4 = arith.constant 5.000000e-01 : f32
    %5 = vector.broadcast %cst_4 : f32 to vector<256x128xf32>
    %6 = arith.addf %4, %5 : vector<256x128xf32>
    %7 = math.floor %6 : vector<256x128xf32>
    %cst_5 = arith.constant 1.5703125 : f32
    %8 = vector.broadcast %cst_5 : f32 to vector<256x128xf32>
    %9 = arith.mulf %7, %8 : vector<256x128xf32>
    %10 = arith.subf %2, %9 : vector<256x128xf32>
    %cst_6 = arith.constant 4.83751297E-4 : f32
    %11 = vector.broadcast %cst_6 : f32 to vector<256x128xf32>
    %12 = arith.mulf %7, %11 : vector<256x128xf32>
    %13 = arith.subf %10, %12 : vector<256x128xf32>
    %cst_7 = arith.constant 7.549790e-08 : f32
    %14 = vector.broadcast %cst_7 : f32 to vector<256x128xf32>
    %15 = arith.mulf %7, %14 : vector<256x128xf32>
    %16 = arith.subf %13, %15 : vector<256x128xf32>
    %17 = arith.mulf %16, %16 : vector<256x128xf32>
    %18 = arith.mulf %16, %17 : vector<256x128xf32>
    %cst_8 = arith.constant -1.95152956E-4 : f32
    %19 = vector.broadcast %cst_8 : f32 to vector<256x128xf32>
    %20 = arith.mulf %17, %19 : vector<256x128xf32>
    %cst_9 = arith.constant 0.00833216123 : f32
    %21 = vector.broadcast %cst_9 : f32 to vector<256x128xf32>
    %22 = arith.addf %21, %20 : vector<256x128xf32>
    %23 = arith.mulf %17, %22 : vector<256x128xf32>
    %cst_10 = arith.constant -0.166666552 : f32
    %24 = vector.broadcast %cst_10 : f32 to vector<256x128xf32>
    %25 = arith.addf %24, %23 : vector<256x128xf32>
    %26 = arith.mulf %18, %25 : vector<256x128xf32>
    %27 = arith.addf %16, %26 : vector<256x128xf32>
    %cst_11 = arith.constant 5.000000e-01 : f32
    %28 = vector.broadcast %cst_11 : f32 to vector<256x128xf32>
    %29 = arith.mulf %28, %17 : vector<256x128xf32>
    %cst_12 = arith.constant 1.000000e+00 : f32
    %30 = vector.broadcast %cst_12 : f32 to vector<256x128xf32>
    %31 = arith.subf %30, %29 : vector<256x128xf32>
    %32 = arith.mulf %17, %17 : vector<256x128xf32>
    %cst_13 = arith.constant 2.44331568E-5 : f32
    %33 = vector.broadcast %cst_13 : f32 to vector<256x128xf32>
    %34 = arith.mulf %17, %33 : vector<256x128xf32>
    %cst_14 = arith.constant -0.00138873165 : f32
    %35 = vector.broadcast %cst_14 : f32 to vector<256x128xf32>
    %36 = arith.addf %35, %34 : vector<256x128xf32>
    %37 = arith.mulf %17, %36 : vector<256x128xf32>
    %cst_15 = arith.constant 0.0416666456 : f32
    %38 = vector.broadcast %cst_15 : f32 to vector<256x128xf32>
    %39 = arith.addf %38, %37 : vector<256x128xf32>
    %40 = arith.mulf %32, %39 : vector<256x128xf32>
    %41 = arith.addf %31, %40 : vector<256x128xf32>
    %42 = arith.fptosi %7 : vector<256x128xf32> to vector<256x128xi32>
    %c3_i32 = arith.constant 3 : i32
    %43 = vector.broadcast %c3_i32 : i32 to vector<256x128xi32>
    %44 = arith.andi %42, %43 : vector<256x128xi32>
    %c1_i32 = arith.constant 1 : i32
    %45 = vector.broadcast %c1_i32 : i32 to vector<256x128xi32>
    %46 = arith.andi %44, %45 : vector<256x128xi32>
    %c1_i32_16 = arith.constant 1 : i32
    %47 = vector.broadcast %c1_i32_16 : i32 to vector<256x128xi32>
    %48 = arith.cmpi eq, %46, %47 : vector<256x128xi32>
    %49 = arith.select %48, %41, %27 : vector<256x128xi1>, vector<256x128xf32>
    %50 = arith.select %48, %27, %41 : vector<256x128xi1>, vector<256x128xf32>
    %c2_i32 = arith.constant 2 : i32
    %51 = vector.broadcast %c2_i32 : i32 to vector<256x128xi32>
    %52 = arith.cmpi sge, %44, %51 : vector<256x128xi32>
    %cst_17 = arith.constant 0.000000e+00 : f32
    %53 = vector.broadcast %cst_17 : f32 to vector<256x128xf32>
    %54 = arith.subf %53, %49 : vector<256x128xf32>
    %55 = arith.select %52, %54, %49 : vector<256x128xi1>, vector<256x128xf32>
    %c1_i32_18 = arith.constant 1 : i32
    %56 = vector.broadcast %c1_i32_18 : i32 to vector<256x128xi32>
    %57 = arith.cmpi eq, %44, %56 : vector<256x128xi32>
    %c2_i32_19 = arith.constant 2 : i32
    %58 = vector.broadcast %c2_i32_19 : i32 to vector<256x128xi32>
    %59 = arith.cmpi eq, %44, %58 : vector<256x128xi32>
    %60 = arith.ori %57, %59 : vector<256x128xi1>
    %cst_20 = arith.constant 0.000000e+00 : f32
    %61 = vector.broadcast %cst_20 : f32 to vector<256x128xf32>
    %62 = arith.subf %61, %50 : vector<256x128xf32>
    %63 = arith.select %60, %62, %50 : vector<256x128xi1>, vector<256x128xf32>
    %c0_21 = arith.constant 0 : index
    %c0_22 = arith.constant 0 : index
    %64 = vector.load %arg3[%c0_21, %c0_22] : memref<256x259xf32, #tpu.memory_space<vmem>>, vector<256x3xf32>
    tpu.vector_store %arg3[%c0_21, %c0_22], %0 {strides = array<i32>} : memref<256x259xf32, #tpu.memory_space<vmem>>, vector<256x3xf32>,
    %c0_23 = arith.constant 0 : index
    %c3 = arith.constant 3 : index
    %65 = vector.load %arg3[%c0_23, %c3] : memref<256x259xf32, #tpu.memory_space<vmem>>, vector<256x128xf32>
    tpu.vector_store %arg3[%c0_23, %c3], %55 {strides = array<i32>} : memref<256x259xf32, #tpu.memory_space<vmem>>, vector<256x128xf32>,
    %c0_24 = arith.constant 0 : index
    %c131 = arith.constant 131 : index
    %66 = vector.load %arg3[%c0_24, %c131] : memref<256x259xf32, #tpu.memory_space<vmem>>, vector<256x128xf32>
    tpu.vector_store %arg3[%c0_24, %c131], %63 {strides = array<i32>} : memref<256x259xf32, #tpu.memory_space<vmem>>, vector<256x128xf32>,
    return
  }
  func.func @transform_0(%arg0: i32) -> (i32, i32) {
    %c0_i32 = arith.constant 0 : i32
    %c0_i32_0 = arith.constant 0 : i32
    return %arg0, %c0_i32 : i32, i32
  }
  func.func @transform_1(%arg0: i32) -> (i32, i32) {
    %c0_i32 = arith.constant 0 : i32
    %c0_i32_0 = arith.constant 0 : i32
    %c0_i32_1 = arith.constant 0 : i32
    return %c0_i32, %c0_i32_0 : i32, i32
  }
  func.func @transform_2(%arg0: i32) -> (i32, i32) {
    %c0_i32 = arith.constant 0 : i32
    %c0_i32_0 = arith.constant 0 : i32
    return %arg0, %c0_i32 : i32, i32
  }
}

</mosaic_0001>

<llo_original>
// kernel: tpu_custom_call.1
$region0: #{tpu_custom_call.1}
  #allocation0 [shape = 'u32[]', space=smem, size = 0x4, offset = 0x4, fixed_abs, tag = 'smem constant byte address 0x4 - core index']
  #allocation1 [shape = 'u32[144,128]{1,0:T(1,128)}', space=vmem, size = 0x12000, scoped, tag = 'internal scratch']
  %s0 = inlined_call_operand.vmem [shape: f32[256,3], index: 0, kind: input, shape index: {}]
  %s1 = inlined_call_operand.vmem [shape: f32[3,128], index: 1, kind: input, shape index: {}]
  %s2 = inlined_call_operand.vmem [shape: f32[256,259], index: 2, kind: output, shape index: {}]
  %s3 = sld [smem:[#allocation0]]
  $region18: #{tpu_custom_call.1} parent=0
    _
  %s5 = ssub.s32 1, %s3
  %s6 = scalar_select 0, %s5, %s3
  // Predicated region
  $region2: #{tpu_custom_call.1} parent=0 // pred_check
    _
  $region3: #{tpu_custom_call.1} parent=0 // pred_check_branch
    %8 = sbr.rel (0) target = $region5
  $region4: #{tpu_custom_call.1} parent=0 // pred_region
    _
  $region5: #{tpu_custom_call.1} parent=0 // pred_fallthru
    _
  // Predicated region
  $region6: #{tpu_custom_call.1} parent=0 // pred_check
    _
  $region7: #{tpu_custom_call.1} parent=0 // pred_check_branch
    %10 = sbr.rel (0) target = $region9
  $region8: #{tpu_custom_call.1} parent=0 // pred_region
    _
  $region9: #{tpu_custom_call.1} parent=0 // pred_fallthru
    _
  %v11 = vld [vmem:[%s0] sm:$0xff]
  %v12 = vld [vmem:[%s0 + $0x8] sm:$0xff]
  %v13 = vld [vmem:[%s0 + $0x10] sm:$0xff]
  %v14 = vld [vmem:[%s0 + $0x18] sm:$0xff]
  %v15 = vld [vmem:[%s0 + $0x20] sm:$0xff]
  %v16 = vld [vmem:[%s0 + $0x28] sm:$0xff]
  %v17 = vld [vmem:[%s0 + $0x30] sm:$0xff]
  %v18 = vld [vmem:[%s0 + $0x38] sm:$0xff]
  %v19 = vld [vmem:[%s0 + $0x40] sm:$0xff]
  %v20 = vld [vmem:[%s0 + $0x48] sm:$0xff]
  %v21 = vld [vmem:[%s0 + $0x50] sm:$0xff]
  %v22 = vld [vmem:[%s0 + $0x58] sm:$0xff]
  %v23 = vld [vmem:[%s0 + $0x60] sm:$0xff]
  %v24 = vld [vmem:[%s0 + $0x68] sm:$0xff]
  %v25 = vld [vmem:[%s0 + $0x70] sm:$0xff]
  %v26 = vld [vmem:[%s0 + $0x78] sm:$0xff]
  %v27 = vld [vmem:[%s0 + $0x80] sm:$0xff]
  %v28 = vld [vmem:[%s0 + $0x88] sm:$0xff]
  %v29 = vld [vmem:[%s0 + $0x90] sm:$0xff]
  %v30 = vld [vmem:[%s0 + $0x98] sm:$0xff]
  %v31 = vld [vmem:[%s0 + $0xa0] sm:$0xff]
  %v32 = vld [vmem:[%s0 + $0xa8] sm:$0xff]
  %v33 = vld [vmem:[%s0 + $0xb0] sm:$0xff]
  %v34 = vld [vmem:[%s0 + $0xb8] sm:$0xff]
  %v35 = vld [vmem:[%s0 + $0xc0] sm:$0xff]
  %v36 = vld [vmem:[%s0 + $0xc8] sm:$0xff]
  %v37 = vld [vmem:[%s0 + $0xd0] sm:$0xff]
  %v38 = vld [vmem:[%s0 + $0xd8] sm:$0xff]
  %v39 = vld [vmem:[%s0 + $0xe0] sm:$0xff]
  %v40 = vld [vmem:[%s0 + $0xe8] sm:$0xff]
  %v41 = vld [vmem:[%s0 + $0xf0] sm:$0xff]
  %v42 = vld [vmem:[%s0 + $0xf8] sm:$0xff]
  %v43 = vld [vmem:[%s1] sm:$0x7]
  %vm44 = vcmask 23552
  %v46 = vsel %vm44, %v11, 0
  %v49 = vsel %vm44, %v12, 0
  %v52 = vsel %vm44, %v13, 0
  %v55 = vsel %vm44, %v14, 0
  %v58 = vsel %vm44, %v15, 0
  %v61 = vsel %vm44, %v16, 0
  %v64 = vsel %vm44, %v17, 0
  %v67 = vsel %vm44, %v18, 0
  %v70 = vsel %vm44, %v19, 0
  %v73 = vsel %vm44, %v20, 0
  %v76 = vsel %vm44, %v21, 0
  %v79 = vsel %vm44, %v22, 0
  %v82 = vsel %vm44, %v23, 0
  %v85 = vsel %vm44, %v24, 0
  %v88 = vsel %vm44, %v25, 0
  %v91 = vsel %vm44, %v26, 0
  %v94 = vsel %vm44, %v27, 0
  %v97 = vsel %vm44, %v28, 0
  %v100 = vsel %vm44, %v29, 0
  %v103 = vsel %vm44, %v30, 0
  %v106 = vsel %vm44, %v31, 0
  %v109 = vsel %vm44, %v32, 0
  %v112 = vsel %vm44, %v33, 0
  %v115 = vsel %vm44, %v34, 0
  %v118 = vsel %vm44, %v35, 0
  %v121 = vsel %vm44, %v36, 0
  %v124 = vsel %vm44, %v37, 0
  %v127 = vsel %vm44, %v38, 0
  %v130 = vsel %vm44, %v39, 0
  %v133 = vsel %vm44, %v40, 0
  %v136 = vsel %vm44, %v41, 0
  %v139 = vsel %vm44, %v42, 0
  %vm141 = vcmask 1042432
  %v143 = vsel %vm141, %v43, 0
  %145 = vmatprep.subr.mxu0 0.0
  %146 = vmatpush1.msra.mxu0 0.0
  %147 = vmatprep.subr.mxu0 0.0
  %148 = vmatpush1.msra.mxu0 0.0
  %149 = vmatprep.subr.mxu0 0.0
  %150 = vmatpush1.msra.mxu0 0.0
  %151 = vmatprep.subr.mxu0 0.0
  %152 = vmatpush1.msra.mxu0 0.0
  %153 = vmatprep.subr.mxu0 0.0
  %154 = vmatpush1.msra.mxu0 0.0
  %155 = vmatprep.subr.mxu0 0.0
  %156 = vmatpush1.msra.mxu0 0.0
  %157 = vmatprep.subr.mxu0 0.0
  %158 = vmatpush1.msra.mxu0 0.0
  %159 = vmatprep.subr.mxu0 0.0
  %160 = vmatpush1.msra.mxu0 0.0
  %161 = vmatprep.subr.mxu0 0.0
  %162 = vmatpush1.msra.mxu0 0.0
  %163 = vmatprep.subr.mxu0 0.0
  %164 = vmatpush1.msra.mxu0 0.0
  %165 = vmatprep.subr.mxu0 0.0
  %166 = vmatpush1.msra.mxu0 0.0
  %167 = vmatprep.subr.mxu0 0.0
  %168 = vmatpush1.msra.mxu0 0.0
  %169 = vmatprep.subr.mxu0 0.0
  %170 = vmatpush1.msra.mxu0 0.0
  %171 = vmatprep.subr.mxu0 0.0
  %172 = vmatpush1.msra.mxu0 0.0
  %173 = vmatprep.subr.mxu0 0.0
  %174 = vmatpush1.msra.mxu0 0.0
  %175 = vmatprep.subr.mxu0 0.0
  %176 = vmatpush1.msra.mxu0 %v143
  %177 = vmatprep.subr.mxu0 0.0
  %178 = vmatpush2.msra.mxu0 0.0
  %179 = vmatprep.subr.mxu0 0.0
  %180 = vmatpush2.msra.mxu0 0.0
  %181 = vmatprep.subr.mxu0 0.0
  %182 = vmatpush2.msra.mxu0 0.0
  %183 = vmatprep.subr.mxu0 0.0
  %184 = vmatpush2.msra.mxu0 0.0
  %185 = vmatprep.subr.mxu0 0.0
  %186 = vmatpush2.msra.mxu0 0.0
  %187 = vmatprep.subr.mxu0 0.0
  %188 = vmatpush2.msra.mxu0 0.0
  %189 = vmatprep.subr.mxu0 0.0
  %190 = vmatpush2.msra.mxu0 0.0
  %191 = vmatprep.subr.mxu0 0.0
  %192 = vmatpush2.msra.mxu0 0.0
  %193 = vmatprep.subr.mxu0 0.0
  %194 = vmatpush2.msra.mxu0 0.0
  %195 = vmatprep.subr.mxu0 0.0
  %196 = vmatpush2.msra.mxu0 0.0
  %197 = vmatprep.subr.mxu0 0.0
  %198 = vmatpush2.msra.mxu0 0.0
  %199 = vmatprep.subr.mxu0 0.0
  %200 = vmatpush2.msra.mxu0 0.0
  %201 = vmatprep.subr.mxu0 0.0
  %202 = vmatpush2.msra.mxu0 0.0
  %203 = vmatprep.subr.mxu0 0.0
  %204 = vmatpush2.msra.mxu0 0.0
  %205 = vmatprep.subr.mxu0 0.0
  %206 = vmatpush2.msra.mxu0 0.0
  %207 = vmatprep.subr.mxu0 0.0
  %208 = vmatpush2.msra.mxu0 0.0
  %209 = vmatprep.mubr.f32.mxu0 0.0
  %210 = vmatmul.mubr.f32.gmra.mxu0 %v46
  %v211 = vpop.f32.mrf.mxu0
  %v212 = vadd.f32 0.0, %v211
  %v213 = vpop.f32.mrf.mxu0
  %214 = vmatprep.mubr.f32.mxu0 0.0
  %215 = vmatmul.mubr.f32.gmra.mxu0 %v49
  %v216 = vpop.f32.mrf.mxu0
  %v217 = vadd.f32 0.0, %v216
  %v218 = vpop.f32.mrf.mxu0
  %219 = vmatprep.mubr.f32.mxu0 0.0
  %220 = vmatmul.mubr.f32.gmra.mxu0 %v52
  %v221 = vpop.f32.mrf.mxu0
  %v222 = vadd.f32 0.0, %v221
  %v223 = vpop.f32.mrf.mxu0
  %224 = vmatprep.mubr.f32.mxu0 0.0
  %225 = vmatmul.mubr.f32.gmra.mxu0 %v55
  %v226 = vpop.f32.mrf.mxu0
  %v227 = vadd.f32 0.0, %v226
  %v228 = vpop.f32.mrf.mxu0
  %229 = vmatprep.mubr.f32.mxu0 0.0
  %230 = vmatmul.mubr.f32.gmra.mxu0 %v58
  %v231 = vpop.f32.mrf.mxu0
  %v232 = vadd.f32 0.0, %v231
  %v233 = vpop.f32.mrf.mxu0
  %234 = vmatprep.mubr.f32.mxu0 0.0
  %235 = vmatmul.mubr.f32.gmra.mxu0 %v61
  %v236 = vpop.f32.mrf.mxu0
  %v237 = vadd.f32 0.0, %v236
  %v238 = vpop.f32.mrf.mxu0
  %239 = vmatprep.mubr.f32.mxu0 0.0
  %240 = vmatmul.mubr.f32.gmra.mxu0 %v64
  %v241 = vpop.f32.mrf.mxu0
  %v242 = vadd.f32 0.0, %v241
  %v243 = vpop.f32.mrf.mxu0
  %244 = vmatprep.mubr.f32.mxu0 0.0
  %245 = vmatmul.mubr.f32.gmra.mxu0 %v67
  %v246 = vpop.f32.mrf.mxu0
  %v247 = vadd.f32 0.0, %v246
  %v248 = vpop.f32.mrf.mxu0
  %249 = vmatprep.mubr.f32.mxu0 0.0
  %250 = vmatmul.mubr.f32.gmra.mxu0 %v70
  %v251 = vpop.f32.mrf.mxu0
  %v252 = vadd.f32 0.0, %v251
  %v253 = vpop.f32.mrf.mxu0
  %254 = vmatprep.mubr.f32.mxu0 0.0
  %255 = vmatmul.mubr.f32.gmra.mxu0 %v73
  %v256 = vpop.f32.mrf.mxu0
  %v257 = vadd.f32 0.0, %v256
  %v258 = vpop.f32.mrf.mxu0
  %259 = vmatprep.mubr.f32.mxu0 0.0
  %260 = vmatmul.mubr.f32.gmra.mxu0 %v76
  %v261 = vpop.f32.mrf.mxu0
  %v262 = vadd.f32 0.0, %v261
  %v263 = vpop.f32.mrf.mxu0
  %264 = vmatprep.mubr.f32.mxu0 0.0
  %265 = vmatmul.mubr.f32.gmra.mxu0 %v79
  %v266 = vpop.f32.mrf.mxu0
  %v267 = vadd.f32 0.0, %v266
  %v268 = vpop.f32.mrf.mxu0
  %269 = vmatprep.mubr.f32.mxu0 0.0
  %270 = vmatmul.mubr.f32.gmra.mxu0 %v82
  %v271 = vpop.f32.mrf.mxu0
  %v272 = vadd.f32 0.0, %v271
  %v273 = vpop.f32.mrf.mxu0
  %274 = vmatprep.mubr.f32.mxu0 0.0
  %275 = vmatmul.mubr.f32.gmra.mxu0 %v85
  %v276 = vpop.f32.mrf.mxu0
  %v277 = vadd.f32 0.0, %v276
  %v278 = vpop.f32.mrf.mxu0
  %279 = vmatprep.mubr.f32.mxu0 0.0
  %280 = vmatmul.mubr.f32.gmra.mxu0 %v88
  %v281 = vpop.f32.mrf.mxu0
  %v282 = vadd.f32 0.0, %v281
  %v283 = vpop.f32.mrf.mxu0
  %284 = vmatprep.mubr.f32.mxu0 0.0
  %285 = vmatmul.mubr.f32.gmra.mxu0 %v91
  %v286 = vpop.f32.mrf.mxu0
  %v287 = vadd.f32 0.0, %v286
  %v288 = vpop.f32.mrf.mxu0
  %289 = vmatprep.mubr.f32.mxu0 0.0
  %290 = vmatmul.mubr.f32.gmra.mxu0 %v94
  %v291 = vpop.f32.mrf.mxu0
  %v292 = vadd.f32 0.0, %v291
  %v293 = vpop.f32.mrf.mxu0
  %294 = vmatprep.mubr.f32.mxu0 0.0
  %295 = vmatmul.mubr.f32.gmra.mxu0 %v97
  %v296 = vpop.f32.mrf.mxu0
  %v297 = vadd.f32 0.0, %v296
  %v298 = vpop.f32.mrf.mxu0
  %299 = vmatprep.mubr.f32.mxu0 0.0
  %300 = vmatmul.mubr.f32.gmra.mxu0 %v100
  %v301 = vpop.f32.mrf.mxu0
  %v302 = vadd.f32 0.0, %v301
  %v303 = vpop.f32.mrf.mxu0
  %304 = vmatprep.mubr.f32.mxu0 0.0
  %305 = vmatmul.mubr.f32.gmra.mxu0 %v103
  %v306 = vpop.f32.mrf.mxu0
  %v307 = vadd.f32 0.0, %v306
  %v308 = vpop.f32.mrf.mxu0
  %309 = vmatprep.mubr.f32.mxu0 0.0
  %310 = vmatmul.mubr.f32.gmra.mxu0 %v106
  %v311 = vpop.f32.mrf.mxu0
  %v312 = vadd.f32 0.0, %v311
  %v313 = vpop.f32.mrf.mxu0
  %314 = vmatprep.mubr.f32.mxu0 0.0
  %315 = vmatmul.mubr.f32.gmra.mxu0 %v109
  %v316 = vpop.f32.mrf.mxu0
  %v317 = vadd.f32 0.0, %v316
  %v318 = vpop.f32.mrf.mxu0
  %319 = vmatprep.mubr.f32.mxu0 0.0
  %320 = vmatmul.mubr.f32.gmra.mxu0 %v112
  %v321 = vpop.f32.mrf.mxu0
  %v322 = vadd.f32 0.0, %v321
  %v323 = vpop.f32.mrf.mxu0
  %324 = vmatprep.mubr.f32.mxu0 0.0
  %325 = vmatmul.mubr.f32.gmra.mxu0 %v115
  %v326 = vpop.f32.mrf.mxu0
  %v327 = vadd.f32 0.0, %v326
  %v328 = vpop.f32.mrf.mxu0
  %329 = vmatprep.mubr.f32.mxu0 0.0
  %330 = vmatmul.mubr.f32.gmra.mxu0 %v118
  %v331 = vpop.f32.mrf.mxu0
  %v332 = vadd.f32 0.0, %v331
  %v333 = vpop.f32.mrf.mxu0
  %334 = vmatprep.mubr.f32.mxu0 0.0
  %335 = vmatmul.mubr.f32.gmra.mxu0 %v121
  %v336 = vpop.f32.mrf.mxu0
  %v337 = vadd.f32 0.0, %v336
  %v338 = vpop.f32.mrf.mxu0
  %339 = vmatprep.mubr.f32.mxu0 0.0
  %340 = vmatmul.mubr.f32.gmra.mxu0 %v124
  %v341 = vpop.f32.mrf.mxu0
  %v342 = vadd.f32 0.0, %v341
  %v343 = vpop.f32.mrf.mxu0
  %344 = vmatprep.mubr.f32.mxu0 0.0
  %345 = vmatmul.mubr.f32.gmra.mxu0 %v127
  %v346 = vpop.f32.mrf.mxu0
  %v347 = vadd.f32 0.0, %v346
  %v348 = vpop.f32.mrf.mxu0
  %349 = vmatprep.mubr.f32.mxu0 0.0
  %350 = vmatmul.mubr.f32.gmra.mxu0 %v130
  %v351 = vpop.f32.mrf.mxu0
  %v352 = vadd.f32 0.0, %v351
  %v353 = vpop.f32.mrf.mxu0
  %354 = vmatprep.mubr.f32.mxu0 0.0
  %355 = vmatmul.mubr.f32.gmra.mxu0 %v133
  %v356 = vpop.f32.mrf.mxu0
  %v357 = vadd.f32 0.0, %v356
  %v358 = vpop.f32.mrf.mxu0
  %359 = vmatprep.mubr.f32.mxu0 0.0
  %360 = vmatmul.mubr.f32.gmra.mxu0 %v136
  %v361 = vpop.f32.mrf.mxu0
  %v362 = vadd.f32 0.0, %v361
  %v363 = vpop.f32.mrf.mxu0
  %364 = vmatprep.mubr.f32.mxu0 0.0
  %365 = vmatmul.mubr.f32.gmra.mxu0 %v139
  %v366 = vpop.f32.mrf.mxu0
  %v367 = vadd.f32 0.0, %v366
  %v368 = vpop.f32.mrf.mxu0
  %369 = vdwg.mxu0
  %v370 = vmul.f32 %v212, 0.63661975
  %v371 = vmul.f32 %v217, 0.63661975
  %v372 = vmul.f32 %v222, 0.63661975
  %v373 = vmul.f32 %v227, 0.63661975
  %v374 = vmul.f32 %v232, 0.63661975
  %v375 = vmul.f32 %v237, 0.63661975
  %v376 = vmul.f32 %v242, 0.63661975
  %v377 = vmul.f32 %v247, 0.63661975
  %v378 = vmul.f32 %v252, 0.63661975
  %v379 = vmul.f32 %v257, 0.63661975
  %v380 = vmul.f32 %v262, 0.63661975
  %v381 = vmul.f32 %v267, 0.63661975
  %v382 = vmul.f32 %v272, 0.63661975
  %v383 = vmul.f32 %v277, 0.63661975
  %v384 = vmul.f32 %v282, 0.63661975
  %v385 = vmul.f32 %v287, 0.63661975
  %v386 = vmul.f32 %v292, 0.63661975
  %v387 = vmul.f32 %v297, 0.63661975
  %v388 = vmul.f32 %v302, 0.63661975
  %v389 = vmul.f32 %v307, 0.63661975
  %v390 = vmul.f32 %v312, 0.63661975
  %v391 = vmul.f32 %v317, 0.63661975
  %v392 = vmul.f32 %v322, 0.63661975
  %v393 = vmul.f32 %v327, 0.63661975
  %v394 = vmul.f32 %v332, 0.63661975
  %v395 = vmul.f32 %v337, 0.63661975
  %v396 = vmul.f32 %v342, 0.63661975
  %v397 = vmul.f32 %v347, 0.63661975
  %v398 = vmul.f32 %v352, 0.63661975
  %v399 = vmul.f32 %v357, 0.63661975
  %v400 = vmul.f32 %v362, 0.63661975
  %v401 = vmul.f32 %v367, 0.63661975
  %v402 = vadd.f32 %v370, 0.5
  %v403 = vadd.f32 %v371, 0.5
  %v404 = vadd.f32 %v372, 0.5
  %v405 = vadd.f32 %v373, 0.5
  %v406 = vadd.f32 %v374, 0.5
  %v407 = vadd.f32 %v375, 0.5
  %v408 = vadd.f32 %v376, 0.5
  %v409 = vadd.f32 %v377, 0.5
  %v410 = vadd.f32 %v378, 0.5
  %v411 = vadd.f32 %v379, 0.5
  %v412 = vadd.f32 %v380, 0.5
  %v413 = vadd.f32 %v381, 0.5
  %v414 = vadd.f32 %v382, 0.5
  %v415 = vadd.f32 %v383, 0.5
  %v416 = vadd.f32 %v384, 0.5
  %v417 = vadd.f32 %v385, 0.5
  %v418 = vadd.f32 %v386, 0.5
  %v419 = vadd.f32 %v387, 0.5
  %v420 = vadd.f32 %v388, 0.5
  %v421 = vadd.f32 %v389, 0.5
  %v422 = vadd.f32 %v390, 0.5
  %v423 = vadd.f32 %v391, 0.5
  %v424 = vadd.f32 %v392, 0.5
  %v425 = vadd.f32 %v393, 0.5
  %v426 = vadd.f32 %v394, 0.5
  %v427 = vadd.f32 %v395, 0.5
  %v428 = vadd.f32 %v396, 0.5
  %v429 = vadd.f32 %v397, 0.5
  %v430 = vadd.f32 %v398, 0.5
  %v431 = vadd.f32 %v399, 0.5
  %v432 = vadd.f32 %v400, 0.5
  %v433 = vadd.f32 %v401, 0.5
  %v434 = vfloor.f32 %v402
  %v435 = vfloor.f32 %v403
  %v436 = vfloor.f32 %v404
  %v437 = vfloor.f32 %v405
  %v438 = vfloor.f32 %v406
  %v439 = vfloor.f32 %v407
  %v440 = vfloor.f32 %v408
  %v441 = vfloor.f32 %v409
  %v442 = vfloor.f32 %v410
  %v443 = vfloor.f32 %v411
  %v444 = vfloor.f32 %v412
  %v445 = vfloor.f32 %v413
  %v446 = vfloor.f32 %v414
  %v447 = vfloor.f32 %v415
  %v448 = vfloor.f32 %v416
  %v449 = vfloor.f32 %v417
  %v450 = vfloor.f32 %v418
  %v451 = vfloor.f32 %v419
  %v452 = vfloor.f32 %v420
  %v453 = vfloor.f32 %v421
  %v454 = vfloor.f32 %v422
  %v455 = vfloor.f32 %v423
  %v456 = vfloor.f32 %v424
  %v457 = vfloor.f32 %v425
  %v458 = vfloor.f32 %v426
  %v459 = vfloor.f32 %v427
  %v460 = vfloor.f32 %v428
  %v461 = vfloor.f32 %v429
  %v462 = vfloor.f32 %v430
  %v463 = vfloor.f32 %v431
  %v464 = vfloor.f32 %v432
  %v465 = vfloor.f32 %v433
  %v466 = vmul.f32 %v434, 1.5703125
  %v467 = vmul.f32 %v435, 1.5703125
  %v468 = vmul.f32 %v436, 1.5703125
  %v469 = vmul.f32 %v437, 1.5703125
  %v470 = vmul.f32 %v438, 1.5703125
  %v471 = vmul.f32 %v439, 1.5703125
  %v472 = vmul.f32 %v440, 1.5703125
  %v473 = vmul.f32 %v441, 1.5703125
  %v474 = vmul.f32 %v442, 1.5703125
  %v475 = vmul.f32 %v443, 1.5703125
  %v476 = vmul.f32 %v444, 1.5703125
  %v477 = vmul.f32 %v445, 1.5703125
  %v478 = vmul.f32 %v446, 1.5703125
  %v479 = vmul.f32 %v447, 1.5703125
  %v480 = vmul.f32 %v448, 1.5703125
  %v481 = vmul.f32 %v449, 1.5703125
  %v482 = vmul.f32 %v450, 1.5703125
  %v483 = vmul.f32 %v451, 1.5703125
  %v484 = vmul.f32 %v452, 1.5703125
  %v485 = vmul.f32 %v453, 1.5703125
  %v486 = vmul.f32 %v454, 1.5703125
  %v487 = vmul.f32 %v455, 1.5703125
  %v488 = vmul.f32 %v456, 1.5703125
  %v489 = vmul.f32 %v457, 1.5703125
  %v490 = vmul.f32 %v458, 1.5703125
  %v491 = vmul.f32 %v459, 1.5703125
  %v492 = vmul.f32 %v460, 1.5703125
  %v493 = vmul.f32 %v461, 1.5703125
  %v494 = vmul.f32 %v462, 1.5703125
  %v495 = vmul.f32 %v463, 1.5703125
  %v496 = vmul.f32 %v464, 1.5703125
  %v497 = vmul.f32 %v465, 1.5703125
  %v498 = vsub.f32 %v212, %v466
  %v499 = vsub.f32 %v217, %v467
  %v500 = vsub.f32 %v222, %v468
  %v501 = vsub.f32 %v227, %v469
  %v502 = vsub.f32 %v232, %v470
  %v503 = vsub.f32 %v237, %v471
  %v504 = vsub.f32 %v242, %v472
  %v505 = vsub.f32 %v247, %v473
  %v506 = vsub.f32 %v252, %v474
  %v507 = vsub.f32 %v257, %v475
  %v508 = vsub.f32 %v262, %v476
  %v509 = vsub.f32 %v267, %v477
  %v510 = vsub.f32 %v272, %v478
  %v511 = vsub.f32 %v277, %v479
  %v512 = vsub.f32 %v282, %v480
  %v513 = vsub.f32 %v287, %v481
  %v514 = vsub.f32 %v292, %v482
  %v515 = vsub.f32 %v297, %v483
  %v516 = vsub.f32 %v302, %v484
  %v517 = vsub.f32 %v307, %v485
  %v518 = vsub.f32 %v312, %v486
  %v519 = vsub.f32 %v317, %v487
  %v520 = vsub.f32 %v322, %v488
  %v521 = vsub.f32 %v327, %v489
  %v522 = vsub.f32 %v332, %v490
  %v523 = vsub.f32 %v337, %v491
  %v524 = vsub.f32 %v342, %v492
  %v525 = vsub.f32 %v347, %v493
  %v526 = vsub.f32 %v352, %v494
  %v527 = vsub.f32 %v357, %v495
  %v528 = vsub.f32 %v362, %v496
  %v529 = vsub.f32 %v367, %v497
  %v530 = vmul.f32 %v434, 0.0004837513
  %v531 = vmul.f32 %v435, 0.0004837513
  %v532 = vmul.f32 %v436, 0.0004837513
  %v533 = vmul.f32 %v437, 0.0004837513
  %v534 = vmul.f32 %v438, 0.0004837513
  %v535 = vmul.f32 %v439, 0.0004837513
  %v536 = vmul.f32 %v440, 0.0004837513
  %v537 = vmul.f32 %v441, 0.0004837513
  %v538 = vmul.f32 %v442, 0.0004837513
  %v539 = vmul.f32 %v443, 0.0004837513
  %v540 = vmul.f32 %v444, 0.0004837513
  %v541 = vmul.f32 %v445, 0.0004837513
  %v542 = vmul.f32 %v446, 0.0004837513
  %v543 = vmul.f32 %v447, 0.0004837513
  %v544 = vmul.f32 %v448, 0.0004837513
  %v545 = vmul.f32 %v449, 0.0004837513
  %v546 = vmul.f32 %v450, 0.0004837513
  %v547 = vmul.f32 %v451, 0.0004837513
  %v548 = vmul.f32 %v452, 0.0004837513
  %v549 = vmul.f32 %v453, 0.0004837513
  %v550 = vmul.f32 %v454, 0.0004837513
  %v551 = vmul.f32 %v455, 0.0004837513
  %v552 = vmul.f32 %v456, 0.0004837513
  %v553 = vmul.f32 %v457, 0.0004837513
  %v554 = vmul.f32 %v458, 0.0004837513
  %v555 = vmul.f32 %v459, 0.0004837513
  %v556 = vmul.f32 %v460, 0.0004837513
  %v557 = vmul.f32 %v461, 0.0004837513
  %v558 = vmul.f32 %v462, 0.0004837513
  %v559 = vmul.f32 %v463, 0.0004837513
  %v560 = vmul.f32 %v464, 0.0004837513
  %v561 = vmul.f32 %v465, 0.0004837513
  %v562 = vsub.f32 %v498, %v530
  %v563 = vsub.f32 %v499, %v531
  %v564 = vsub.f32 %v500, %v532
  %v565 = vsub.f32 %v501, %v533
  %v566 = vsub.f32 %v502, %v534
  %v567 = vsub.f32 %v503, %v535
  %v568 = vsub.f32 %v504, %v536
  %v569 = vsub.f32 %v505, %v537
  %v570 = vsub.f32 %v506, %v538
  %v571 = vsub.f32 %v507, %v539
  %v572 = vsub.f32 %v508, %v540
  %v573 = vsub.f32 %v509, %v541
  %v574 = vsub.f32 %v510, %v542
  %v575 = vsub.f32 %v511, %v543
  %v576 = vsub.f32 %v512, %v544
  %v577 = vsub.f32 %v513, %v545
  %v578 = vsub.f32 %v514, %v546
  %v579 = vsub.f32 %v515, %v547
  %v580 = vsub.f32 %v516, %v548
  %v581 = vsub.f32 %v517, %v549
  %v582 = vsub.f32 %v518, %v550
  %v583 = vsub.f32 %v519, %v551
  %v584 = vsub.f32 %v520, %v552
  %v585 = vsub.f32 %v521, %v553
  %v586 = vsub.f32 %v522, %v554
  %v587 = vsub.f32 %v523, %v555
  %v588 = vsub.f32 %v524, %v556
  %v589 = vsub.f32 %v525, %v557
  %v590 = vsub.f32 %v526, %v558
  %v591 = vsub.f32 %v527, %v559
  %v592 = vsub.f32 %v528, %v560
  %v593 = vsub.f32 %v529, %v561
  %v594 = vmul.f32 %v434, 7.54979e-08
  %v595 = vmul.f32 %v435, 7.54979e-08
  %v596 = vmul.f32 %v436, 7.54979e-08
  %v597 = vmul.f32 %v437, 7.54979e-08
  %v598 = vmul.f32 %v438, 7.54979e-08
  %v599 = vmul.f32 %v439, 7.54979e-08
  %v600 = vmul.f32 %v440, 7.54979e-08
  %v601 = vmul.f32 %v441, 7.54979e-08
  %v602 = vmul.f32 %v442, 7.54979e-08
  %v603 = vmul.f32 %v443, 7.54979e-08
  %v604 = vmul.f32 %v444, 7.54979e-08
  %v605 = vmul.f32 %v445, 7.54979e-08
  %v606 = vmul.f32 %v446, 7.54979e-08
  %v607 = vmul.f32 %v447, 7.54979e-08
  %v608 = vmul.f32 %v448, 7.54979e-08
  %v609 = vmul.f32 %v449, 7.54979e-08
  %v610 = vmul.f32 %v450, 7.54979e-08
  %v611 = vmul.f32 %v451, 7.54979e-08
  %v612 = vmul.f32 %v452, 7.54979e-08
  %v613 = vmul.f32 %v453, 7.54979e-08
  %v614 = vmul.f32 %v454, 7.54979e-08
  %v615 = vmul.f32 %v455, 7.54979e-08
  %v616 = vmul.f32 %v456, 7.54979e-08
  %v617 = vmul.f32 %v457, 7.54979e-08
  %v618 = vmul.f32 %v458, 7.54979e-08
  %v619 = vmul.f32 %v459, 7.54979e-08
  %v620 = vmul.f32 %v460, 7.54979e-08
  %v621 = vmul.f32 %v461, 7.54979e-08
  %v622 = vmul.f32 %v462, 7.54979e-08
  %v623 = vmul.f32 %v463, 7.54979e-08
  %v624 = vmul.f32 %v464, 7.54979e-08
  %v625 = vmul.f32 %v465, 7.54979e-08
  %v626 = vsub.f32 %v562, %v594
  %v627 = vsub.f32 %v563, %v595
  %v628 = vsub.f32 %v564, %v596
  %v629 = vsub.f32 %v565, %v597
  %v630 = vsub.f32 %v566, %v598
  %v631 = vsub.f32 %v567, %v599
  %v632 = vsub.f32 %v568, %v600
  %v633 = vsub.f32 %v569, %v601
  %v634 = vsub.f32 %v570, %v602
  %v635 = vsub.f32 %v571, %v603
  %v636 = vsub.f32 %v572, %v604
  %v637 = vsub.f32 %v573, %v605
  %v638 = vsub.f32 %v574, %v606
  %v639 = vsub.f32 %v575, %v607
  %v640 = vsub.f32 %v576, %v608
  %v641 = vsub.f32 %v577, %v609
  %v642 = vsub.f32 %v578, %v610
  %v643 = vsub.f32 %v579, %v611
  %v644 = vsub.f32 %v580, %v612
  %v645 = vsub.f32 %v581, %v613
  %v646 = vsub.f32 %v582, %v614
  %v647 = vsub.f32 %v583, %v615
  %v648 = vsub.f32 %v584, %v616
  %v649 = vsub.f32 %v585, %v617
  %v650 = vsub.f32 %v586, %v618
  %v651 = vsub.f32 %v587, %v619
  %v652 = vsub.f32 %v588, %v620
  %v653 = vsub.f32 %v589, %v621
  %v654 = vsub.f32 %v590, %v622
  %v655 = vsub.f32 %v591, %v623
  %v656 = vsub.f32 %v592, %v624
  %v657 = vsub.f32 %v593, %v625
  %v658 = vmul.f32 %v626, %v626
  %v659 = vmul.f32 %v627, %v627
  %v660 = vmul.f32 %v628, %v628
  %v661 = vmul.f32 %v629, %v629
  %v662 = vmul.f32 %v630, %v630
  %v663 = vmul.f32 %v631, %v631
  %v664 = vmul.f32 %v632, %v632
  %v665 = vmul.f32 %v633, %v633
  %v666 = vmul.f32 %v634, %v634
  %v667 = vmul.f32 %v635, %v635
  %v668 = vmul.f32 %v636, %v636
  %v669 = vmul.f32 %v637, %v637
  %v670 = vmul.f32 %v638, %v638
  %v671 = vmul.f32 %v639, %v639
  %v672 = vmul.f32 %v640, %v640
  %v673 = vmul.f32 %v641, %v641
  %v674 = vmul.f32 %v642, %v642
  %v675 = vmul.f32 %v643, %v643
  %v676 = vmul.f32 %v644, %v644
  %v677 = vmul.f32 %v645, %v645
  %v678 = vmul.f32 %v646, %v646
  %v679 = vmul.f32 %v647, %v647
  %v680 = vmul.f32 %v648, %v648
  %v681 = vmul.f32 %v649, %v649
  %v682 = vmul.f32 %v650, %v650
  %v683 = vmul.f32 %v651, %v651
  %v684 = vmul.f32 %v652, %v652
  %v685 = vmul.f32 %v653, %v653
  %v686 = vmul.f32 %v654, %v654
  %v687 = vmul.f32 %v655, %v655
  %v688 = vmul.f32 %v656, %v656
  %v689 = vmul.f32 %v657, %v657
  %v690 = vmul.f32 %v626, %v658
  %v691 = vmul.f32 %v627, %v659
  %v692 = vmul.f32 %v628, %v660
  %v693 = vmul.f32 %v629, %v661
  %v694 = vmul.f32 %v630, %v662
  %v695 = vmul.f32 %v631, %v663
  %v696 = vmul.f32 %v632, %v664
  %v697 = vmul.f32 %v633, %v665
  %v698 = vmul.f32 %v634, %v666
  %v699 = vmul.f32 %v635, %v667
  %v700 = vmul.f32 %v636, %v668
  %v701 = vmul.f32 %v637, %v669
  %v702 = vmul.f32 %v638, %v670
  %v703 = vmul.f32 %v639, %v671
  %v704 = vmul.f32 %v640, %v672
  %v705 = vmul.f32 %v641, %v673
  %v706 = vmul.f32 %v642, %v674
  %v707 = vmul.f32 %v643, %v675
  %v708 = vmul.f32 %v644, %v676
  %v709 = vmul.f32 %v645, %v677
  %v710 = vmul.f32 %v646, %v678
  %v711 = vmul.f32 %v647, %v679
  %v712 = vmul.f32 %v648, %v680
  %v713 = vmul.f32 %v649, %v681
  %v714 = vmul.f32 %v650, %v682
  %v715 = vmul.f32 %v651, %v683
  %v716 = vmul.f32 %v652, %v684
  %v717 = vmul.f32 %v653, %v685
  %v718 = vmul.f32 %v654, %v686
  %v719 = vmul.f32 %v655, %v687
  %v720 = vmul.f32 %v656, %v688
  %v721 = vmul.f32 %v657, %v689
  %v722 = vmul.f32 %v658, -0.00019515296
  %v723 = vmul.f32 %v659, -0.00019515296
  %v724 = vmul.f32 %v660, -0.00019515296
  %v725 = vmul.f32 %v661, -0.00019515296
  %v726 = vmul.f32 %v662, -0.00019515296
  %v727 = vmul.f32 %v663, -0.00019515296
  %v728 = vmul.f32 %v664, -0.00019515296
  %v729 = vmul.f32 %v665, -0.00019515296
  %v730 = vmul.f32 %v666, -0.00019515296
  %v731 = vmul.f32 %v667, -0.00019515296
  %v732 = vmul.f32 %v668, -0.00019515296
  %v733 = vmul.f32 %v669, -0.00019515296
  %v734 = vmul.f32 %v670, -0.00019515296
  %v735 = vmul.f32 %v671, -0.00019515296
  %v736 = vmul.f32 %v672, -0.00019515296
  %v737 = vmul.f32 %v673, -0.00019515296
  %v738 = vmul.f32 %v674, -0.00019515296
  %v739 = vmul.f32 %v675, -0.00019515296
  %v740 = vmul.f32 %v676, -0.00019515296
  %v741 = vmul.f32 %v677, -0.00019515296
  %v742 = vmul.f32 %v678, -0.00019515296
  %v743 = vmul.f32 %v679, -0.00019515296
  %v744 = vmul.f32 %v680, -0.00019515296
  %v745 = vmul.f32 %v681, -0.00019515296
  %v746 = vmul.f32 %v682, -0.00019515296
  %v747 = vmul.f32 %v683, -0.00019515296
  %v748 = vmul.f32 %v684, -0.00019515296
  %v749 = vmul.f32 %v685, -0.00019515296
  %v750 = vmul.f32 %v686, -0.00019515296
  %v751 = vmul.f32 %v687, -0.00019515296
  %v752 = vmul.f32 %v688, -0.00019515296
  %v753 = vmul.f32 %v689, -0.00019515296
  %v754 = vadd.f32 %v722, 0.008332161
  %v755 = vadd.f32 %v723, 0.008332161
  %v756 = vadd.f32 %v724, 0.008332161
  %v757 = vadd.f32 %v725, 0.008332161
  %v758 = vadd.f32 %v726, 0.008332161
  %v759 = vadd.f32 %v727, 0.008332161
  %v760 = vadd.f32 %v728, 0.008332161
  %v761 = vadd.f32 %v729, 0.008332161
  %v762 = vadd.f32 %v730, 0.008332161
  %v763 = vadd.f32 %v731, 0.008332161
  %v764 = vadd.f32 %v732, 0.008332161
  %v765 = vadd.f32 %v733, 0.008332161
  %v766 = vadd.f32 %v734, 0.008332161
  %v767 = vadd.f32 %v735, 0.008332161
  %v768 = vadd.f32 %v736, 0.008332161
  %v769 = vadd.f32 %v737, 0.008332161
  %v770 = vadd.f32 %v738, 0.008332161
  %v771 = vadd.f32 %v739, 0.008332161
  %v772 = vadd.f32 %v740, 0.008332161
  %v773 = vadd.f32 %v741, 0.008332161
  %v774 = vadd.f32 %v742, 0.008332161
  %v775 = vadd.f32 %v743, 0.008332161
  %v776 = vadd.f32 %v744, 0.008332161
  %v777 = vadd.f32 %v745, 0.008332161
  %v778 = vadd.f32 %v746, 0.008332161
  %v779 = vadd.f32 %v747, 0.008332161
  %v780 = vadd.f32 %v748, 0.008332161
  %v781 = vadd.f32 %v749, 0.008332161
  %v782 = vadd.f32 %v750, 0.008332161
  %v783 = vadd.f32 %v751, 0.008332161
  %v784 = vadd.f32 %v752, 0.008332161
  %v785 = vadd.f32 %v753, 0.008332161
  %v786 = vmul.f32 %v658, %v754
  %v787 = vmul.f32 %v659, %v755
  %v788 = vmul.f32 %v660, %v756
  %v789 = vmul.f32 %v661, %v757
  %v790 = vmul.f32 %v662, %v758
  %v791 = vmul.f32 %v663, %v759
  %v792 = vmul.f32 %v664, %v760
  %v793 = vmul.f32 %v665, %v761
  %v794 = vmul.f32 %v666, %v762
  %v795 = vmul.f32 %v667, %v763
  %v796 = vmul.f32 %v668, %v764
  %v797 = vmul.f32 %v669, %v765
  %v798 = vmul.f32 %v670, %v766
  %v799 = vmul.f32 %v671, %v767
  %v800 = vmul.f32 %v672, %v768
  %v801 = vmul.f32 %v673, %v769
  %v802 = vmul.f32 %v674, %v770
  %v803 = vmul.f32 %v675, %v771
  %v804 = vmul.f32 %v676, %v772
  %v805 = vmul.f32 %v677, %v773
  %v806 = vmul.f32 %v678, %v774
  %v807 = vmul.f32 %v679, %v775
  %v808 = vmul.f32 %v680, %v776
  %v809 = vmul.f32 %v681, %v777
  %v810 = vmul.f32 %v682, %v778
  %v811 = vmul.f32 %v683, %v779
  %v812 = vmul.f32 %v684, %v780
  %v813 = vmul.f32 %v685, %v781
  %v814 = vmul.f32 %v686, %v782
  %v815 = vmul.f32 %v687, %v783
  %v816 = vmul.f32 %v688, %v784
  %v817 = vmul.f32 %v689, %v785
  %v818 = vadd.f32 %v786, -0.16666655
  %v819 = vadd.f32 %v787, -0.16666655
  %v820 = vadd.f32 %v788, -0.16666655
  %v821 = vadd.f32 %v789, -0.16666655
  %v822 = vadd.f32 %v790, -0.16666655
  %v823 = vadd.f32 %v791, -0.16666655
  %v824 = vadd.f32 %v792, -0.16666655
  %v825 = vadd.f32 %v793, -0.16666655
  %v826 = vadd.f32 %v794, -0.16666655
  %v827 = vadd.f32 %v795, -0.16666655
  %v828 = vadd.f32 %v796, -0.16666655
  %v829 = vadd.f32 %v797, -0.16666655
  %v830 = vadd.f32 %v798, -0.16666655
  %v831 = vadd.f32 %v799, -0.16666655
  %v832 = vadd.f32 %v800, -0.16666655
  %v833 = vadd.f32 %v801, -0.16666655
  %v834 = vadd.f32 %v802, -0.16666655
  %v835 = vadd.f32 %v803, -0.16666655
  %v836 = vadd.f32 %v804, -0.16666655
  %v837 = vadd.f32 %v805, -0.16666655
  %v838 = vadd.f32 %v806, -0.16666655
  %v839 = vadd.f32 %v807, -0.16666655
  %v840 = vadd.f32 %v808, -0.16666655
  %v841 = vadd.f32 %v809, -0.16666655
  %v842 = vadd.f32 %v810, -0.16666655
  %v843 = vadd.f32 %v811, -0.16666655
  %v844 = vadd.f32 %v812, -0.16666655
  %v845 = vadd.f32 %v813, -0.16666655
  %v846 = vadd.f32 %v814, -0.16666655
  %v847 = vadd.f32 %v815, -0.16666655
  %v848 = vadd.f32 %v816, -0.16666655
  %v849 = vadd.f32 %v817, -0.16666655
  %v850 = vmul.f32 %v690, %v818
  %v851 = vmul.f32 %v691, %v819
  %v852 = vmul.f32 %v692, %v820
  %v853 = vmul.f32 %v693, %v821
  %v854 = vmul.f32 %v694, %v822
  %v855 = vmul.f32 %v695, %v823
  %v856 = vmul.f32 %v696, %v824
  %v857 = vmul.f32 %v697, %v825
  %v858 = vmul.f32 %v698, %v826
  %v859 = vmul.f32 %v699, %v827
  %v860 = vmul.f32 %v700, %v828
  %v861 = vmul.f32 %v701, %v829
  %v862 = vmul.f32 %v702, %v830
  %v863 = vmul.f32 %v703, %v831
  %v864 = vmul.f32 %v704, %v832
  %v865 = vmul.f32 %v705, %v833
  %v866 = vmul.f32 %v706, %v834
  %v867 = vmul.f32 %v707, %v835
  %v868 = vmul.f32 %v708, %v836
  %v869 = vmul.f32 %v709, %v837
  %v870 = vmul.f32 %v710, %v838
  %v871 = vmul.f32 %v711, %v839
  %v872 = vmul.f32 %v712, %v840
  %v873 = vmul.f32 %v713, %v841
  %v874 = vmul.f32 %v714, %v842
  %v875 = vmul.f32 %v715, %v843
  %v876 = vmul.f32 %v716, %v844
  %v877 = vmul.f32 %v717, %v845
  %v878 = vmul.f32 %v718, %v846
  %v879 = vmul.f32 %v719, %v847
  %v880 = vmul.f32 %v720, %v848
  %v881 = vmul.f32 %v721, %v849
  %v882 = vadd.f32 %v626, %v850
  %v883 = vadd.f32 %v627, %v851
  %v884 = vadd.f32 %v628, %v852
  %v885 = vadd.f32 %v629, %v853
  %v886 = vadd.f32 %v630, %v854
  %v887 = vadd.f32 %v631, %v855
  %v888 = vadd.f32 %v632, %v856
  %v889 = vadd.f32 %v633, %v857
  %v890 = vadd.f32 %v634, %v858
  %v891 = vadd.f32 %v635, %v859
  %v892 = vadd.f32 %v636, %v860
  %v893 = vadd.f32 %v637, %v861
  %v894 = vadd.f32 %v638, %v862
  %v895 = vadd.f32 %v639, %v863
  %v896 = vadd.f32 %v640, %v864
  %v897 = vadd.f32 %v641, %v865
  %v898 = vadd.f32 %v642, %v866
  %v899 = vadd.f32 %v643, %v867
  %v900 = vadd.f32 %v644, %v868
  %v901 = vadd.f32 %v645, %v869
  %v902 = vadd.f32 %v646, %v870
  %v903 = vadd.f32 %v647, %v871
  %v904 = vadd.f32 %v648, %v872
  %v905 = vadd.f32 %v649, %v873
  %v906 = vadd.f32 %v650, %v874
  %v907 = vadd.f32 %v651, %v875
  %v908 = vadd.f32 %v652, %v876
  %v909 = vadd.f32 %v653, %v877
  %v910 = vadd.f32 %v654, %v878
  %v911 = vadd.f32 %v655, %v879
  %v912 = vadd.f32 %v656, %v880
  %v913 = vadd.f32 %v657, %v881
  %v914 = vmul.f32 %v658, 0.5
  %v915 = vmul.f32 %v659, 0.5
  %v916 = vmul.f32 %v660, 0.5
  %v917 = vmul.f32 %v661, 0.5
  %v918 = vmul.f32 %v662, 0.5
  %v919 = vmul.f32 %v663, 0.5
  %v920 = vmul.f32 %v664, 0.5
  %v921 = vmul.f32 %v665, 0.5
  %v922 = vmul.f32 %v666, 0.5
  %v923 = vmul.f32 %v667, 0.5
  %v924 = vmul.f32 %v668, 0.5
  %v925 = vmul.f32 %v669, 0.5
  %v926 = vmul.f32 %v670, 0.5
  %v927 = vmul.f32 %v671, 0.5
  %v928 = vmul.f32 %v672, 0.5
  %v929 = vmul.f32 %v673, 0.5
  %v930 = vmul.f32 %v674, 0.5
  %v931 = vmul.f32 %v675, 0.5
  %v932 = vmul.f32 %v676, 0.5
  %v933 = vmul.f32 %v677, 0.5
  %v934 = vmul.f32 %v678, 0.5
  %v935 = vmul.f32 %v679, 0.5
  %v936 = vmul.f32 %v680, 0.5
  %v937 = vmul.f32 %v681, 0.5
  %v938 = vmul.f32 %v682, 0.5
  %v939 = vmul.f32 %v683, 0.5
  %v940 = vmul.f32 %v684, 0.5
  %v941 = vmul.f32 %v685, 0.5
  %v942 = vmul.f32 %v686, 0.5
  %v943 = vmul.f32 %v687, 0.5
  %v944 = vmul.f32 %v688, 0.5
  %v945 = vmul.f32 %v689, 0.5
  %v946 = vsub.f32 1.0, %v914
  %v947 = vsub.f32 1.0, %v915
  %v948 = vsub.f32 1.0, %v916
  %v949 = vsub.f32 1.0, %v917
  %v950 = vsub.f32 1.0, %v918
  %v951 = vsub.f32 1.0, %v919
  %v952 = vsub.f32 1.0, %v920
  %v953 = vsub.f32 1.0, %v921
  %v954 = vsub.f32 1.0, %v922
  %v955 = vsub.f32 1.0, %v923
  %v956 = vsub.f32 1.0, %v924
  %v957 = vsub.f32 1.0, %v925
  %v958 = vsub.f32 1.0, %v926
  %v959 = vsub.f32 1.0, %v927
  %v960 = vsub.f32 1.0, %v928
  %v961 = vsub.f32 1.0, %v929
  %v962 = vsub.f32 1.0, %v930
  %v963 = vsub.f32 1.0, %v931
  %v964 = vsub.f32 1.0, %v932
  %v965 = vsub.f32 1.0, %v933
  %v966 = vsub.f32 1.0, %v934
  %v967 = vsub.f32 1.0, %v935
  %v968 = vsub.f32 1.0, %v936
  %v969 = vsub.f32 1.0, %v937
  %v970 = vsub.f32 1.0, %v938
  %v971 = vsub.f32 1.0, %v939
  %v972 = vsub.f32 1.0, %v940
  %v973 = vsub.f32 1.0, %v941
  %v974 = vsub.f32 1.0, %v942
  %v975 = vsub.f32 1.0, %v943
  %v976 = vsub.f32 1.0, %v944
  %v977 = vsub.f32 1.0, %v945
  %v978 = vmul.f32 %v658, %v658
  %v979 = vmul.f32 %v659, %v659
  %v980 = vmul.f32 %v660, %v660
  %v981 = vmul.f32 %v661, %v661
  %v982 = vmul.f32 %v662, %v662
  %v983 = vmul.f32 %v663, %v663
  %v984 = vmul.f32 %v664, %v664
  %v985 = vmul.f32 %v665, %v665
  %v986 = vmul.f32 %v666, %v666
  %v987 = vmul.f32 %v667, %v667
  %v988 = vmul.f32 %v668, %v668
  %v989 = vmul.f32 %v669, %v669
  %v990 = vmul.f32 %v670, %v670
  %v991 = vmul.f32 %v671, %v671
  %v992 = vmul.f32 %v672, %v672
  %v993 = vmul.f32 %v673, %v673
  %v994 = vmul.f32 %v674, %v674
  %v995 = vmul.f32 %v675, %v675
  %v996 = vmul.f32 %v676, %v676
  %v997 = vmul.f32 %v677, %v677
  %v998 = vmul.f32 %v678, %v678
  %v999 = vmul.f32 %v679, %v679
  %v1000 = vmul.f32 %v680, %v680
  %v1001 = vmul.f32 %v681, %v681
  %v1002 = vmul.f32 %v682, %v682
  %v1003 = vmul.f32 %v683, %v683
  %v1004 = vmul.f32 %v684, %v684
  %v1005 = vmul.f32 %v685, %v685
  %v1006 = vmul.f32 %v686, %v686
  %v1007 = vmul.f32 %v687, %v687
  %v1008 = vmul.f32 %v688, %v688
  %v1009 = vmul.f32 %v689, %v689
  %v1010 = vmul.f32 %v658, 2.4433157e-05
  %v1011 = vmul.f32 %v659, 2.4433157e-05
  %v1012 = vmul.f32 %v660, 2.4433157e-05
  %v1013 = vmul.f32 %v661, 2.4433157e-05
  %v1014 = vmul.f32 %v662, 2.4433157e-05
  %v1015 = vmul.f32 %v663, 2.4433157e-05
  %v1016 = vmul.f32 %v664, 2.4433157e-05
  %v1017 = vmul.f32 %v665, 2.4433157e-05
  %v1018 = vmul.f32 %v666, 2.4433157e-05
  %v1019 = vmul.f32 %v667, 2.4433157e-05
  %v1020 = vmul.f32 %v668, 2.4433157e-05
  %v1021 = vmul.f32 %v669, 2.4433157e-05
  %v1022 = vmul.f32 %v670, 2.4433157e-05
  %v1023 = vmul.f32 %v671, 2.4433157e-05
  %v1024 = vmul.f32 %v672, 2.4433157e-05
  %v1025 = vmul.f32 %v673, 2.4433157e-05
  %v1026 = vmul.f32 %v674, 2.4433157e-05
  %v1027 = vmul.f32 %v675, 2.4433157e-05
  %v1028 = vmul.f32 %v676, 2.4433157e-05
  %v1029 = vmul.f32 %v677, 2.4433157e-05
  %v1030 = vmul.f32 %v678, 2.4433157e-05
  %v1031 = vmul.f32 %v679, 2.4433157e-05
  %v1032 = vmul.f32 %v680, 2.4433157e-05
  %v1033 = vmul.f32 %v681, 2.4433157e-05
  %v1034 = vmul.f32 %v682, 2.4433157e-05
  %v1035 = vmul.f32 %v683, 2.4433157e-05
  %v1036 = vmul.f32 %v684, 2.4433157e-05
  %v1037 = vmul.f32 %v685, 2.4433157e-05
  %v1038 = vmul.f32 %v686, 2.4433157e-05
  %v1039 = vmul.f32 %v687, 2.4433157e-05
  %v1040 = vmul.f32 %v688, 2.4433157e-05
  %v1041 = vmul.f32 %v689, 2.4433157e-05
  %v1042 = vadd.f32 %v1010, -0.0013887316
  %v1043 = vadd.f32 %v1011, -0.0013887316
  %v1044 = vadd.f32 %v1012, -0.0013887316
  %v1045 = vadd.f32 %v1013, -0.0013887316
  %v1046 = vadd.f32 %v1014, -0.0013887316
  %v1047 = vadd.f32 %v1015, -0.0013887316
  %v1048 = vadd.f32 %v1016, -0.0013887316
  %v1049 = vadd.f32 %v1017, -0.0013887316
  %v1050 = vadd.f32 %v1018, -0.0013887316
  %v1051 = vadd.f32 %v1019, -0.0013887316
  %v1052 = vadd.f32 %v1020, -0.0013887316
  %v1053 = vadd.f32 %v1021, -0.0013887316
  %v1054 = vadd.f32 %v1022, -0.0013887316
  %v1055 = vadd.f32 %v1023, -0.0013887316
  %v1056 = vadd.f32 %v1024, -0.0013887316
  %v1057 = vadd.f32 %v1025, -0.0013887316
  %v1058 = vadd.f32 %v1026, -0.0013887316
  %v1059 = vadd.f32 %v1027, -0.0013887316
  %v1060 = vadd.f32 %v1028, -0.0013887316
  %v1061 = vadd.f32 %v1029, -0.0013887316
  %v1062 = vadd.f32 %v1030, -0.0013887316
  %v1063 = vadd.f32 %v1031, -0.0013887316
  %v1064 = vadd.f32 %v1032, -0.0013887316
  %v1065 = vadd.f32 %v1033, -0.0013887316
  %v1066 = vadd.f32 %v1034, -0.0013887316
  %v1067 = vadd.f32 %v1035, -0.0013887316
  %v1068 = vadd.f32 %v1036, -0.0013887316
  %v1069 = vadd.f32 %v1037, -0.0013887316
  %v1070 = vadd.f32 %v1038, -0.0013887316
  %v1071 = vadd.f32 %v1039, -0.0013887316
  %v1072 = vadd.f32 %v1040, -0.0013887316
  %v1073 = vadd.f32 %v1041, -0.0013887316
  %v1074 = vmul.f32 %v658, %v1042
  %v1075 = vmul.f32 %v659, %v1043
  %v1076 = vmul.f32 %v660, %v1044
  %v1077 = vmul.f32 %v661, %v1045
  %v1078 = vmul.f32 %v662, %v1046
  %v1079 = vmul.f32 %v663, %v1047
  %v1080 = vmul.f32 %v664, %v1048
  %v1081 = vmul.f32 %v665, %v1049
  %v1082 = vmul.f32 %v666, %v1050
  %v1083 = vmul.f32 %v667, %v1051
  %v1084 = vmul.f32 %v668, %v1052
  %v1085 = vmul.f32 %v669, %v1053
  %v1086 = vmul.f32 %v670, %v1054
  %v1087 = vmul.f32 %v671, %v1055
  %v1088 = vmul.f32 %v672, %v1056
  %v1089 = vmul.f32 %v673, %v1057
  %v1090 = vmul.f32 %v674, %v1058
  %v1091 = vmul.f32 %v675, %v1059
  %v1092 = vmul.f32 %v676, %v1060
  %v1093 = vmul.f32 %v677, %v1061
  %v1094 = vmul.f32 %v678, %v1062
  %v1095 = vmul.f32 %v679, %v1063
  %v1096 = vmul.f32 %v680, %v1064
  %v1097 = vmul.f32 %v681, %v1065
  %v1098 = vmul.f32 %v682, %v1066
  %v1099 = vmul.f32 %v683, %v1067
  %v1100 = vmul.f32 %v684, %v1068
  %v1101 = vmul.f32 %v685, %v1069
  %v1102 = vmul.f32 %v686, %v1070
  %v1103 = vmul.f32 %v687, %v1071
  %v1104 = vmul.f32 %v688, %v1072
  %v1105 = vmul.f32 %v689, %v1073
  %v1106 = vadd.f32 %v1074, 0.041666646
  %v1107 = vadd.f32 %v1075, 0.041666646
  %v1108 = vadd.f32 %v1076, 0.041666646
  %v1109 = vadd.f32 %v1077, 0.041666646
  %v1110 = vadd.f32 %v1078, 0.041666646
  %v1111 = vadd.f32 %v1079, 0.041666646
  %v1112 = vadd.f32 %v1080, 0.041666646
  %v1113 = vadd.f32 %v1081, 0.041666646
  %v1114 = vadd.f32 %v1082, 0.041666646
  %v1115 = vadd.f32 %v1083, 0.041666646
  %v1116 = vadd.f32 %v1084, 0.041666646
  %v1117 = vadd.f32 %v1085, 0.041666646
  %v1118 = vadd.f32 %v1086, 0.041666646
  %v1119 = vadd.f32 %v1087, 0.041666646
  %v1120 = vadd.f32 %v1088, 0.041666646
  %v1121 = vadd.f32 %v1089, 0.041666646
  %v1122 = vadd.f32 %v1090, 0.041666646
  %v1123 = vadd.f32 %v1091, 0.041666646
  %v1124 = vadd.f32 %v1092, 0.041666646
  %v1125 = vadd.f32 %v1093, 0.041666646
  %v1126 = vadd.f32 %v1094, 0.041666646
  %v1127 = vadd.f32 %v1095, 0.041666646
  %v1128 = vadd.f32 %v1096, 0.041666646
  %v1129 = vadd.f32 %v1097, 0.041666646
  %v1130 = vadd.f32 %v1098, 0.041666646
  %v1131 = vadd.f32 %v1099, 0.041666646
  %v1132 = vadd.f32 %v1100, 0.041666646
  %v1133 = vadd.f32 %v1101, 0.041666646
  %v1134 = vadd.f32 %v1102, 0.041666646
  %v1135 = vadd.f32 %v1103, 0.041666646
  %v1136 = vadd.f32 %v1104, 0.041666646
  %v1137 = vadd.f32 %v1105, 0.041666646
  %v1138 = vmul.f32 %v978, %v1106
  %v1139 = vmul.f32 %v979, %v1107
  %v1140 = vmul.f32 %v980, %v1108
  %v1141 = vmul.f32 %v981, %v1109
  %v1142 = vmul.f32 %v982, %v1110
  %v1143 = vmul.f32 %v983, %v1111
  %v1144 = vmul.f32 %v984, %v1112
  %v1145 = vmul.f32 %v985, %v1113
  %v1146 = vmul.f32 %v986, %v1114
  %v1147 = vmul.f32 %v987, %v1115
  %v1148 = vmul.f32 %v988, %v1116
  %v1149 = vmul.f32 %v989, %v1117
  %v1150 = vmul.f32 %v990, %v1118
  %v1151 = vmul.f32 %v991, %v1119
  %v1152 = vmul.f32 %v992, %v1120
  %v1153 = vmul.f32 %v993, %v1121
  %v1154 = vmul.f32 %v994, %v1122
  %v1155 = vmul.f32 %v995, %v1123
  %v1156 = vmul.f32 %v996, %v1124
  %v1157 = vmul.f32 %v997, %v1125
  %v1158 = vmul.f32 %v998, %v1126
  %v1159 = vmul.f32 %v999, %v1127
  %v1160 = vmul.f32 %v1000, %v1128
  %v1161 = vmul.f32 %v1001, %v1129
  %v1162 = vmul.f32 %v1002, %v1130
  %v1163 = vmul.f32 %v1003, %v1131
  %v1164 = vmul.f32 %v1004, %v1132
  %v1165 = vmul.f32 %v1005, %v1133
  %v1166 = vmul.f32 %v1006, %v1134
  %v1167 = vmul.f32 %v1007, %v1135
  %v1168 = vmul.f32 %v1008, %v1136
  %v1169 = vmul.f32 %v1009, %v1137
  %v1170 = vadd.f32 %v946, %v1138
  %v1171 = vadd.f32 %v947, %v1139
  %v1172 = vadd.f32 %v948, %v1140
  %v1173 = vadd.f32 %v949, %v1141
  %v1174 = vadd.f32 %v950, %v1142
  %v1175 = vadd.f32 %v951, %v1143
  %v1176 = vadd.f32 %v952, %v1144
  %v1177 = vadd.f32 %v953, %v1145
  %v1178 = vadd.f32 %v954, %v1146
  %v1179 = vadd.f32 %v955, %v1147
  %v1180 = vadd.f32 %v956, %v1148
  %v1181 = vadd.f32 %v957, %v1149
  %v1182 = vadd.f32 %v958, %v1150
  %v1183 = vadd.f32 %v959, %v1151
  %v1184 = vadd.f32 %v960, %v1152
  %v1185 = vadd.f32 %v961, %v1153
  %v1186 = vadd.f32 %v962, %v1154
  %v1187 = vadd.f32 %v963, %v1155
  %v1188 = vadd.f32 %v964, %v1156
  %v1189 = vadd.f32 %v965, %v1157
  %v1190 = vadd.f32 %v966, %v1158
  %v1191 = vadd.f32 %v967, %v1159
  %v1192 = vadd.f32 %v968, %v1160
  %v1193 = vadd.f32 %v969, %v1161
  %v1194 = vadd.f32 %v970, %v1162
  %v1195 = vadd.f32 %v971, %v1163
  %v1196 = vadd.f32 %v972, %v1164
  %v1197 = vadd.f32 %v973, %v1165
  %v1198 = vadd.f32 %v974, %v1166
  %v1199 = vadd.f32 %v975, %v1167
  %v1200 = vadd.f32 %v976, %v1168
  %v1201 = vadd.f32 %v977, %v1169
  %v1202 = vcvt.f32.s32.to.zero.pseudo %v434
  %v1203 = vcvt.f32.s32.to.zero.pseudo %v435
  %v1204 = vcvt.f32.s32.to.zero.pseudo %v436
  %v1205 = vcvt.f32.s32.to.zero.pseudo %v437
  %v1206 = vcvt.f32.s32.to.zero.pseudo %v438
  %v1207 = vcvt.f32.s32.to.zero.pseudo %v439
  %v1208 = vcvt.f32.s32.to.zero.pseudo %v440
  %v1209 = vcvt.f32.s32.to.zero.pseudo %v441
  %v1210 = vcvt.f32.s32.to.zero.pseudo %v442
  %v1211 = vcvt.f32.s32.to.zero.pseudo %v443
  %v1212 = vcvt.f32.s32.to.zero.pseudo %v444
  %v1213 = vcvt.f32.s32.to.zero.pseudo %v445
  %v1214 = vcvt.f32.s32.to.zero.pseudo %v446
  %v1215 = vcvt.f32.s32.to.zero.pseudo %v447
  %v1216 = vcvt.f32.s32.to.zero.pseudo %v448
  %v1217 = vcvt.f32.s32.to.zero.pseudo %v449
  %v1218 = vcvt.f32.s32.to.zero.pseudo %v450
  %v1219 = vcvt.f32.s32.to.zero.pseudo %v451
  %v1220 = vcvt.f32.s32.to.zero.pseudo %v452
  %v1221 = vcvt.f32.s32.to.zero.pseudo %v453
  %v1222 = vcvt.f32.s32.to.zero.pseudo %v454
  %v1223 = vcvt.f32.s32.to.zero.pseudo %v455
  %v1224 = vcvt.f32.s32.to.zero.pseudo %v456
  %v1225 = vcvt.f32.s32.to.zero.pseudo %v457
  %v1226 = vcvt.f32.s32.to.zero.pseudo %v458
  %v1227 = vcvt.f32.s32.to.zero.pseudo %v459
  %v1228 = vcvt.f32.s32.to.zero.pseudo %v460
  %v1229 = vcvt.f32.s32.to.zero.pseudo %v461
  %v1230 = vcvt.f32.s32.to.zero.pseudo %v462
  %v1231 = vcvt.f32.s32.to.zero.pseudo %v463
  %v1232 = vcvt.f32.s32.to.zero.pseudo %v464
  %v1233 = vcvt.f32.s32.to.zero.pseudo %v465
  %v1234 = vand.u32 %v1202, 3
  %v1235 = vand.u32 %v1203, 3
  %v1236 = vand.u32 %v1204, 3
  %v1237 = vand.u32 %v1205, 3
  %v1238 = vand.u32 %v1206, 3
  %v1239 = vand.u32 %v1207, 3
  %v1240 = vand.u32 %v1208, 3
  %v1241 = vand.u32 %v1209, 3
  %v1242 = vand.u32 %v1210, 3
  %v1243 = vand.u32 %v1211, 3
  %v1244 = vand.u32 %v1212, 3
  %v1245 = vand.u32 %v1213, 3
  %v1246 = vand.u32 %v1214, 3
  %v1247 = vand.u32 %v1215, 3
  %v1248 = vand.u32 %v1216, 3
  %v1249 = vand.u32 %v1217, 3
  %v1250 = vand.u32 %v1218, 3
  %v1251 = vand.u32 %v1219, 3
  %v1252 = vand.u32 %v1220, 3
  %v1253 = vand.u32 %v1221, 3
  %v1254 = vand.u32 %v1222, 3
  %v1255 = vand.u32 %v1223, 3
  %v1256 = vand.u32 %v1224, 3
  %v1257 = vand.u32 %v1225, 3
  %v1258 = vand.u32 %v1226, 3
  %v1259 = vand.u32 %v1227, 3
  %v1260 = vand.u32 %v1228, 3
  %v1261 = vand.u32 %v1229, 3
  %v1262 = vand.u32 %v1230, 3
  %v1263 = vand.u32 %v1231, 3
  %v1264 = vand.u32 %v1232, 3
  %v1265 = vand.u32 %v1233, 3
  %v1266 = vand.u32 %v1234, 1
  %v1267 = vand.u32 %v1235, 1
  %v1268 = vand.u32 %v1236, 1
  %v1269 = vand.u32 %v1237, 1
  %v1270 = vand.u32 %v1238, 1
  %v1271 = vand.u32 %v1239, 1
  %v1272 = vand.u32 %v1240, 1
  %v1273 = vand.u32 %v1241, 1
  %v1274 = vand.u32 %v1242, 1
  %v1275 = vand.u32 %v1243, 1
  %v1276 = vand.u32 %v1244, 1
  %v1277 = vand.u32 %v1245, 1
  %v1278 = vand.u32 %v1246, 1
  %v1279 = vand.u32 %v1247, 1
  %v1280 = vand.u32 %v1248, 1
  %v1281 = vand.u32 %v1249, 1
  %v1282 = vand.u32 %v1250, 1
  %v1283 = vand.u32 %v1251, 1
  %v1284 = vand.u32 %v1252, 1
  %v1285 = vand.u32 %v1253, 1
  %v1286 = vand.u32 %v1254, 1
  %v1287 = vand.u32 %v1255, 1
  %v1288 = vand.u32 %v1256, 1
  %v1289 = vand.u32 %v1257, 1
  %v1290 = vand.u32 %v1258, 1
  %v1291 = vand.u32 %v1259, 1
  %v1292 = vand.u32 %v1260, 1
  %v1293 = vand.u32 %v1261, 1
  %v1294 = vand.u32 %v1262, 1
  %v1295 = vand.u32 %v1263, 1
  %v1296 = vand.u32 %v1264, 1
  %v1297 = vand.u32 %v1265, 1
  %vm1298 = vcmp.eq.s32.totalorder %v1266, 1
  %vm1299 = vcmp.eq.s32.totalorder %v1267, 1
  %vm1300 = vcmp.eq.s32.totalorder %v1268, 1
  %vm1301 = vcmp.eq.s32.totalorder %v1269, 1
  %vm1302 = vcmp.eq.s32.totalorder %v1270, 1
  %vm1303 = vcmp.eq.s32.totalorder %v1271, 1
  %vm1304 = vcmp.eq.s32.totalorder %v1272, 1
  %vm1305 = vcmp.eq.s32.totalorder %v1273, 1
  %vm1306 = vcmp.eq.s32.totalorder %v1274, 1
  %vm1307 = vcmp.eq.s32.totalorder %v1275, 1
  %vm1308 = vcmp.eq.s32.totalorder %v1276, 1
  %vm1309 = vcmp.eq.s32.totalorder %v1277, 1
  %vm1310 = vcmp.eq.s32.totalorder %v1278, 1
  %vm1311 = vcmp.eq.s32.totalorder %v1279, 1
  %vm1312 = vcmp.eq.s32.totalorder %v1280, 1
  %vm1313 = vcmp.eq.s32.totalorder %v1281, 1
  %vm1314 = vcmp.eq.s32.totalorder %v1282, 1
  %vm1315 = vcmp.eq.s32.totalorder %v1283, 1
  %vm1316 = vcmp.eq.s32.totalorder %v1284, 1
  %vm1317 = vcmp.eq.s32.totalorder %v1285, 1
  %vm1318 = vcmp.eq.s32.totalorder %v1286, 1
  %vm1319 = vcmp.eq.s32.totalorder %v1287, 1
  %vm1320 = vcmp.eq.s32.totalorder %v1288, 1
  %vm1321 = vcmp.eq.s32.totalorder %v1289, 1
  %vm1322 = vcmp.eq.s32.totalorder %v1290, 1
  %vm1323 = vcmp.eq.s32.totalorder %v1291, 1
  %vm1324 = vcmp.eq.s32.totalorder %v1292, 1
  %vm1325 = vcmp.eq.s32.totalorder %v1293, 1
  %vm1326 = vcmp.eq.s32.totalorder %v1294, 1
  %vm1327 = vcmp.eq.s32.totalorder %v1295, 1
  %vm1328 = vcmp.eq.s32.totalorder %v1296, 1
  %vm1329 = vcmp.eq.s32.totalorder %v1297, 1
  %v1330 = vsel %vm1298, %v1170, %v882
  %v1331 = vsel %vm1299, %v1171, %v883
  %v1332 = vsel %vm1300, %v1172, %v884
  %v1333 = vsel %vm1301, %v1173, %v885
  %v1334 = vsel %vm1302, %v1174, %v886
  %v1335 = vsel %vm1303, %v1175, %v887
  %v1336 = vsel %vm1304, %v1176, %v888
  %v1337 = vsel %vm1305, %v1177, %v889
  %v1338 = vsel %vm1306, %v1178, %v890
  %v1339 = vsel %vm1307, %v1179, %v891
  %v1340 = vsel %vm1308, %v1180, %v892
  %v1341 = vsel %vm1309, %v1181, %v893
  %v1342 = vsel %vm1310, %v1182, %v894
  %v1343 = vsel %vm1311, %v1183, %v895
  %v1344 = vsel %vm1312, %v1184, %v896
  %v1345 = vsel %vm1313, %v1185, %v897
  %v1346 = vsel %vm1314, %v1186, %v898
  %v1347 = vsel %vm1315, %v1187, %v899
  %v1348 = vsel %vm1316, %v1188, %v900
  %v1349 = vsel %vm1317, %v1189, %v901
  %v1350 = vsel %vm1318, %v1190, %v902
  %v1351 = vsel %vm1319, %v1191, %v903
  %v1352 = vsel %vm1320, %v1192, %v904
  %v1353 = vsel %vm1321, %v1193, %v905
  %v1354 = vsel %vm1322, %v1194, %v906
  %v1355 = vsel %vm1323, %v1195, %v907
  %v1356 = vsel %vm1324, %v1196, %v908
  %v1357 = vsel %vm1325, %v1197, %v909
  %v1358 = vsel %vm1326, %v1198, %v910
  %v1359 = vsel %vm1327, %v1199, %v911
  %v1360 = vsel %vm1328, %v1200, %v912
  %v1361 = vsel %vm1329, %v1201, %v913
  %v1362 = vsel %vm1298, %v882, %v1170
  %v1363 = vsel %vm1299, %v883, %v1171
  %v1364 = vsel %vm1300, %v884, %v1172
  %v1365 = vsel %vm1301, %v885, %v1173
  %v1366 = vsel %vm1302, %v886, %v1174
  %v1367 = vsel %vm1303, %v887, %v1175
  %v1368 = vsel %vm1304, %v888, %v1176
  %v1369 = vsel %vm1305, %v889, %v1177
  %v1370 = vsel %vm1306, %v890, %v1178
  %v1371 = vsel %vm1307, %v891, %v1179
  %v1372 = vsel %vm1308, %v892, %v1180
  %v1373 = vsel %vm1309, %v893, %v1181
  %v1374 = vsel %vm1310, %v894, %v1182
  %v1375 = vsel %vm1311, %v895, %v1183
  %v1376 = vsel %vm1312, %v896, %v1184
  %v1377 = vsel %vm1313, %v897, %v1185
  %v1378 = vsel %vm1314, %v898, %v1186
  %v1379 = vsel %vm1315, %v899, %v1187
  %v1380 = vsel %vm1316, %v900, %v1188
  %v1381 = vsel %vm1317, %v901, %v1189
  %v1382 = vsel %vm1318, %v902, %v1190
  %v1383 = vsel %vm1319, %v903, %v1191
  %v1384 = vsel %vm1320, %v904, %v1192
  %v1385 = vsel %vm1321, %v905, %v1193
  %v1386 = vsel %vm1322, %v906, %v1194
  %v1387 = vsel %vm1323, %v907, %v1195
  %v1388 = vsel %vm1324, %v908, %v1196
  %v1389 = vsel %vm1325, %v909, %v1197
  %v1390 = vsel %vm1326, %v910, %v1198
  %v1391 = vsel %vm1327, %v911, %v1199
  %v1392 = vsel %vm1328, %v912, %v1200
  %v1393 = vsel %vm1329, %v913, %v1201
  %vm1394 = vcmp.ge.s32.totalorder %v1234, 2
  %vm1395 = vcmp.ge.s32.totalorder %v1235, 2
  %vm1396 = vcmp.ge.s32.totalorder %v1236, 2
  %vm1397 = vcmp.ge.s32.totalorder %v1237, 2
  %vm1398 = vcmp.ge.s32.totalorder %v1238, 2
  %vm1399 = vcmp.ge.s32.totalorder %v1239, 2
  %vm1400 = vcmp.ge.s32.totalorder %v1240, 2
  %vm1401 = vcmp.ge.s32.totalorder %v1241, 2
  %vm1402 = vcmp.ge.s32.totalorder %v1242, 2
  %vm1403 = vcmp.ge.s32.totalorder %v1243, 2
  %vm1404 = vcmp.ge.s32.totalorder %v1244, 2
  %vm1405 = vcmp.ge.s32.totalorder %v1245, 2
  %vm1406 = vcmp.ge.s32.totalorder %v1246, 2
  %vm1407 = vcmp.ge.s32.totalorder %v1247, 2
  %vm1408 = vcmp.ge.s32.totalorder %v1248, 2
  %vm1409 = vcmp.ge.s32.totalorder %v1249, 2
  %vm1410 = vcmp.ge.s32.totalorder %v1250, 2
  %vm1411 = vcmp.ge.s32.totalorder %v1251, 2
  %vm1412 = vcmp.ge.s32.totalorder %v1252, 2
  %vm1413 = vcmp.ge.s32.totalorder %v1253, 2
  %vm1414 = vcmp.ge.s32.totalorder %v1254, 2
  %vm1415 = vcmp.ge.s32.totalorder %v1255, 2
  %vm1416 = vcmp.ge.s32.totalorder %v1256, 2
  %vm1417 = vcmp.ge.s32.totalorder %v1257, 2
  %vm1418 = vcmp.ge.s32.totalorder %v1258, 2
  %vm1419 = vcmp.ge.s32.totalorder %v1259, 2
  %vm1420 = vcmp.ge.s32.totalorder %v1260, 2
  %vm1421 = vcmp.ge.s32.totalorder %v1261, 2
  %vm1422 = vcmp.ge.s32.totalorder %v1262, 2
  %vm1423 = vcmp.ge.s32.totalorder %v1263, 2
  %vm1424 = vcmp.ge.s32.totalorder %v1264, 2
  %vm1425 = vcmp.ge.s32.totalorder %v1265, 2
  %v1426 = vsub.f32 0.0, %v1330
  %v1427 = vsub.f32 0.0, %v1331
  %v1428 = vsub.f32 0.0, %v1332
  %v1429 = vsub.f32 0.0, %v1333
  %v1430 = vsub.f32 0.0, %v1334
  %v1431 = vsub.f32 0.0, %v1335
  %v1432 = vsub.f32 0.0, %v1336
  %v1433 = vsub.f32 0.0, %v1337
  %v1434 = vsub.f32 0.0, %v1338
  %v1435 = vsub.f32 0.0, %v1339
  %v1436 = vsub.f32 0.0, %v1340
  %v1437 = vsub.f32 0.0, %v1341
  %v1438 = vsub.f32 0.0, %v1342
  %v1439 = vsub.f32 0.0, %v1343
  %v1440 = vsub.f32 0.0, %v1344
  %v1441 = vsub.f32 0.0, %v1345
  %v1442 = vsub.f32 0.0, %v1346
  %v1443 = vsub.f32 0.0, %v1347
  %v1444 = vsub.f32 0.0, %v1348
  %v1445 = vsub.f32 0.0, %v1349
  %v1446 = vsub.f32 0.0, %v1350
  %v1447 = vsub.f32 0.0, %v1351
  %v1448 = vsub.f32 0.0, %v1352
  %v1449 = vsub.f32 0.0, %v1353
  %v1450 = vsub.f32 0.0, %v1354
  %v1451 = vsub.f32 0.0, %v1355
  %v1452 = vsub.f32 0.0, %v1356
  %v1453 = vsub.f32 0.0, %v1357
  %v1454 = vsub.f32 0.0, %v1358
  %v1455 = vsub.f32 0.0, %v1359
  %v1456 = vsub.f32 0.0, %v1360
  %v1457 = vsub.f32 0.0, %v1361
  %v1458 = vsel %vm1394, %v1426, %v1330
  %v1459 = vsel %vm1395, %v1427, %v1331
  %v1460 = vsel %vm1396, %v1428, %v1332
  %v1461 = vsel %vm1397, %v1429, %v1333
  %v1462 = vsel %vm1398, %v1430, %v1334
  %v1463 = vsel %vm1399, %v1431, %v1335
  %v1464 = vsel %vm1400, %v1432, %v1336
  %v1465 = vsel %vm1401, %v1433, %v1337
  %v1466 = vsel %vm1402, %v1434, %v1338
  %v1467 = vsel %vm1403, %v1435, %v1339
  %v1468 = vsel %vm1404, %v1436, %v1340
  %v1469 = vsel %vm1405, %v1437, %v1341
  %v1470 = vsel %vm1406, %v1438, %v1342
  %v1471 = vsel %vm1407, %v1439, %v1343
  %v1472 = vsel %vm1408, %v1440, %v1344
  %v1473 = vsel %vm1409, %v1441, %v1345
  %v1474 = vsel %vm1410, %v1442, %v1346
  %v1475 = vsel %vm1411, %v1443, %v1347
  %v1476 = vsel %vm1412, %v1444, %v1348
  %v1477 = vsel %vm1413, %v1445, %v1349
  %v1478 = vsel %vm1414, %v1446, %v1350
  %v1479 = vsel %vm1415, %v1447, %v1351
  %v1480 = vsel %vm1416, %v1448, %v1352
  %v1481 = vsel %vm1417, %v1449, %v1353
  %v1482 = vsel %vm1418, %v1450, %v1354
  %v1483 = vsel %vm1419, %v1451, %v1355
  %v1484 = vsel %vm1420, %v1452, %v1356
  %v1485 = vsel %vm1421, %v1453, %v1357
  %v1486 = vsel %vm1422, %v1454, %v1358
  %v1487 = vsel %vm1423, %v1455, %v1359
  %v1488 = vsel %vm1424, %v1456, %v1360
  %v1489 = vsel %vm1425, %v1457, %v1361
  %vm1490 = vcmp.eq.s32.totalorder %v1234, 1
  %vm1491 = vcmp.eq.s32.totalorder %v1235, 1
  %vm1492 = vcmp.eq.s32.totalorder %v1236, 1
  %vm1493 = vcmp.eq.s32.totalorder %v1237, 1
  %vm1494 = vcmp.eq.s32.totalorder %v1238, 1
  %vm1495 = vcmp.eq.s32.totalorder %v1239, 1
  %vm1496 = vcmp.eq.s32.totalorder %v1240, 1
  %vm1497 = vcmp.eq.s32.totalorder %v1241, 1
  %vm1498 = vcmp.eq.s32.totalorder %v1242, 1
  %vm1499 = vcmp.eq.s32.totalorder %v1243, 1
  %vm1500 = vcmp.eq.s32.totalorder %v1244, 1
  %vm1501 = vcmp.eq.s32.totalorder %v1245, 1
  %vm1502 = vcmp.eq.s32.totalorder %v1246, 1
  %vm1503 = vcmp.eq.s32.totalorder %v1247, 1
  %vm1504 = vcmp.eq.s32.totalorder %v1248, 1
  %vm1505 = vcmp.eq.s32.totalorder %v1249, 1
  %vm1506 = vcmp.eq.s32.totalorder %v1250, 1
  %vm1507 = vcmp.eq.s32.totalorder %v1251, 1
  %vm1508 = vcmp.eq.s32.totalorder %v1252, 1
  %vm1509 = vcmp.eq.s32.totalorder %v1253, 1
  %vm1510 = vcmp.eq.s32.totalorder %v1254, 1
  %vm1511 = vcmp.eq.s32.totalorder %v1255, 1
  %vm1512 = vcmp.eq.s32.totalorder %v1256, 1
  %vm1513 = vcmp.eq.s32.totalorder %v1257, 1
  %vm1514 = vcmp.eq.s32.totalorder %v1258, 1
  %vm1515 = vcmp.eq.s32.totalorder %v1259, 1
  %vm1516 = vcmp.eq.s32.totalorder %v1260, 1
  %vm1517 = vcmp.eq.s32.totalorder %v1261, 1
  %vm1518 = vcmp.eq.s32.totalorder %v1262, 1
  %vm1519 = vcmp.eq.s32.totalorder %v1263, 1
  %vm1520 = vcmp.eq.s32.totalorder %v1264, 1
  %vm1521 = vcmp.eq.s32.totalorder %v1265, 1
  %vm1522 = vcmp.eq.s32.totalorder %v1234, 2
  %vm1523 = vcmp.eq.s32.totalorder %v1235, 2
  %vm1524 = vcmp.eq.s32.totalorder %v1236, 2
  %vm1525 = vcmp.eq.s32.totalorder %v1237, 2
  %vm1526 = vcmp.eq.s32.totalorder %v1238, 2
  %vm1527 = vcmp.eq.s32.totalorder %v1239, 2
  %vm1528 = vcmp.eq.s32.totalorder %v1240, 2
  %vm1529 = vcmp.eq.s32.totalorder %v1241, 2
  %vm1530 = vcmp.eq.s32.totalorder %v1242, 2
  %vm1531 = vcmp.eq.s32.totalorder %v1243, 2
  %vm1532 = vcmp.eq.s32.totalorder %v1244, 2
  %vm1533 = vcmp.eq.s32.totalorder %v1245, 2
  %vm1534 = vcmp.eq.s32.totalorder %v1246, 2
  %vm1535 = vcmp.eq.s32.totalorder %v1247, 2
  %vm1536 = vcmp.eq.s32.totalorder %v1248, 2
  %vm1537 = vcmp.eq.s32.totalorder %v1249, 2
  %vm1538 = vcmp.eq.s32.totalorder %v1250, 2
  %vm1539 = vcmp.eq.s32.totalorder %v1251, 2
  %vm1540 = vcmp.eq.s32.totalorder %v1252, 2
  %vm1541 = vcmp.eq.s32.totalorder %v1253, 2
  %vm1542 = vcmp.eq.s32.totalorder %v1254, 2
  %vm1543 = vcmp.eq.s32.totalorder %v1255, 2
  %vm1544 = vcmp.eq.s32.totalorder %v1256, 2
  %vm1545 = vcmp.eq.s32.totalorder %v1257, 2
  %vm1546 = vcmp.eq.s32.totalorder %v1258, 2
  %vm1547 = vcmp.eq.s32.totalorder %v1259, 2
  %vm1548 = vcmp.eq.s32.totalorder %v1260, 2
  %vm1549 = vcmp.eq.s32.totalorder %v1261, 2
  %vm1550 = vcmp.eq.s32.totalorder %v1262, 2
  %vm1551 = vcmp.eq.s32.totalorder %v1263, 2
  %vm1552 = vcmp.eq.s32.totalorder %v1264, 2
  %vm1553 = vcmp.eq.s32.totalorder %v1265, 2
  %vm1554 = vmor %vm1490, %vm1522
  %vm1555 = vmor %vm1491, %vm1523
  %vm1556 = vmor %vm1492, %vm1524
  %vm1557 = vmor %vm1493, %vm1525
  %vm1558 = vmor %vm1494, %vm1526
  %vm1559 = vmor %vm1495, %vm1527
  %vm1560 = vmor %vm1496, %vm1528
  %vm1561 = vmor %vm1497, %vm1529
  %vm1562 = vmor %vm1498, %vm1530
  %vm1563 = vmor %vm1499, %vm1531
  %vm1564 = vmor %vm1500, %vm1532
  %vm1565 = vmor %vm1501, %vm1533
  %vm1566 = vmor %vm1502, %vm1534
  %vm1567 = vmor %vm1503, %vm1535
  %vm1568 = vmor %vm1504, %vm1536
  %vm1569 = vmor %vm1505, %vm1537
  %vm1570 = vmor %vm1506, %vm1538
  %vm1571 = vmor %vm1507, %vm1539
  %vm1572 = vmor %vm1508, %vm1540
  %vm1573 = vmor %vm1509, %vm1541
  %vm1574 = vmor %vm1510, %vm1542
  %vm1575 = vmor %vm1511, %vm1543
  %vm1576 = vmor %vm1512, %vm1544
  %vm1577 = vmor %vm1513, %vm1545
  %vm1578 = vmor %vm1514, %vm1546
  %vm1579 = vmor %vm1515, %vm1547
  %vm1580 = vmor %vm1516, %vm1548
  %vm1581 = vmor %vm1517, %vm1549
  %vm1582 = vmor %vm1518, %vm1550
  %vm1583 = vmor %vm1519, %vm1551
  %vm1584 = vmor %vm1520, %vm1552
  %vm1585 = vmor %vm1521, %vm1553
  %v1586 = vsub.f32 0.0, %v1362
  %v1587 = vsub.f32 0.0, %v1363
  %v1588 = vsub.f32 0.0, %v1364
  %v1589 = vsub.f32 0.0, %v1365
  %v1590 = vsub.f32 0.0, %v1366
  %v1591 = vsub.f32 0.0, %v1367
  %v1592 = vsub.f32 0.0, %v1368
  %v1593 = vsub.f32 0.0, %v1369
  %v1594 = vsub.f32 0.0, %v1370
  %v1595 = vsub.f32 0.0, %v1371
  %v1596 = vsub.f32 0.0, %v1372
  %v1597 = vsub.f32 0.0, %v1373
  %v1598 = vsub.f32 0.0, %v1374
  %v1599 = vsub.f32 0.0, %v1375
  %v1600 = vsub.f32 0.0, %v1376
  %v1601 = vsub.f32 0.0, %v1377
  %v1602 = vsub.f32 0.0, %v1378
  %v1603 = vsub.f32 0.0, %v1379
  %v1604 = vsub.f32 0.0, %v1380
  %v1605 = vsub.f32 0.0, %v1381
  %v1606 = vsub.f32 0.0, %v1382
  %v1607 = vsub.f32 0.0, %v1383
  %v1608 = vsub.f32 0.0, %v1384
  %v1609 = vsub.f32 0.0, %v1385
  %v1610 = vsub.f32 0.0, %v1386
  %v1611 = vsub.f32 0.0, %v1387
  %v1612 = vsub.f32 0.0, %v1388
  %v1613 = vsub.f32 0.0, %v1389
  %v1614 = vsub.f32 0.0, %v1390
  %v1615 = vsub.f32 0.0, %v1391
  %v1616 = vsub.f32 0.0, %v1392
  %v1617 = vsub.f32 0.0, %v1393
  %v1618 = vsel %vm1554, %v1586, %v1362
  %v1619 = vsel %vm1555, %v1587, %v1363
  %v1620 = vsel %vm1556, %v1588, %v1364
  %v1621 = vsel %vm1557, %v1589, %v1365
  %v1622 = vsel %vm1558, %v1590, %v1366
  %v1623 = vsel %vm1559, %v1591, %v1367
  %v1624 = vsel %vm1560, %v1592, %v1368
  %v1625 = vsel %vm1561, %v1593, %v1369
  %v1626 = vsel %vm1562, %v1594, %v1370
  %v1627 = vsel %vm1563, %v1595, %v1371
  %v1628 = vsel %vm1564, %v1596, %v1372
  %v1629 = vsel %vm1565, %v1597, %v1373
  %v1630 = vsel %vm1566, %v1598, %v1374
  %v1631 = vsel %vm1567, %v1599, %v1375
  %v1632 = vsel %vm1568, %v1600, %v1376
  %v1633 = vsel %vm1569, %v1601, %v1377
  %v1634 = vsel %vm1570, %v1602, %v1378
  %v1635 = vsel %vm1571, %v1603, %v1379
  %v1636 = vsel %vm1572, %v1604, %v1380
  %v1637 = vsel %vm1573, %v1605, %v1381
  %v1638 = vsel %vm1574, %v1606, %v1382
  %v1639 = vsel %vm1575, %v1607, %v1383
  %v1640 = vsel %vm1576, %v1608, %v1384
  %v1641 = vsel %vm1577, %v1609, %v1385
  %v1642 = vsel %vm1578, %v1610, %v1386
  %v1643 = vsel %vm1579, %v1611, %v1387
  %v1644 = vsel %vm1580, %v1612, %v1388
  %v1645 = vsel %vm1581, %v1613, %v1389
  %v1646 = vsel %vm1582, %v1614, %v1390
  %v1647 = vsel %vm1583, %v1615, %v1391
  %v1648 = vsel %vm1584, %v1616, %v1392
  %v1649 = vsel %vm1585, %v1617, %v1393
  %1650 = vst.msk [vmem:[%s2] sm:$0xff] %vm44, %v11
  %1651 = vst.msk [vmem:[%s2 + $0x18] sm:$0xff] %vm44, %v12
  %1652 = vst.msk [vmem:[%s2 + $0x30] sm:$0xff] %vm44, %v13
  %1653 = vst.msk [vmem:[%s2 + $0x48] sm:$0xff] %vm44, %v14
  %1654 = vst.msk [vmem:[%s2 + $0x60] sm:$0xff] %vm44, %v15
  %1655 = vst.msk [vmem:[%s2 + $0x78] sm:$0xff] %vm44, %v16
  %1656 = vst.msk [vmem:[%s2 + $0x90] sm:$0xff] %vm44, %v17
  %1657 = vst.msk [vmem:[%s2 + $0xa8] sm:$0xff] %vm44, %v18
  %1658 = vst.msk [vmem:[%s2 + $0xc0] sm:$0xff] %vm44, %v19
  %1659 = vst.msk [vmem:[%s2 + $0xd8] sm:$0xff] %vm44, %v20
  %1660 = vst.msk [vmem:[%s2 + $0xf0] sm:$0xff] %vm44, %v21
  %1661 = vst.msk [vmem:[%s2 + $0x108] sm:$0xff] %vm44, %v22
  %1662 = vst.msk [vmem:[%s2 + $0x120] sm:$0xff] %vm44, %v23
  %1663 = vst.msk [vmem:[%s2 + $0x138] sm:$0xff] %vm44, %v24
  %1664 = vst.msk [vmem:[%s2 + $0x150] sm:$0xff] %vm44, %v25
  %1665 = vst.msk [vmem:[%s2 + $0x168] sm:$0xff] %vm44, %v26
  %1666 = vst.msk [vmem:[%s2 + $0x180] sm:$0xff] %vm44, %v27
  %1667 = vst.msk [vmem:[%s2 + $0x198] sm:$0xff] %vm44, %v28
  %1668 = vst.msk [vmem:[%s2 + $0x1b0] sm:$0xff] %vm44, %v29
  %1669 = vst.msk [vmem:[%s2 + $0x1c8] sm:$0xff] %vm44, %v30
  %1670 = vst.msk [vmem:[%s2 + $0x1e0] sm:$0xff] %vm44, %v31
  %1671 = vst.msk [vmem:[%s2 + $0x1f8] sm:$0xff] %vm44, %v32
  %1672 = vst.msk [vmem:[%s2 + $0x210] sm:$0xff] %vm44, %v33
  %1673 = vst.msk [vmem:[%s2 + $0x228] sm:$0xff] %vm44, %v34
  %1674 = vst.msk [vmem:[%s2 + $0x240] sm:$0xff] %vm44, %v35
  %1675 = vst.msk [vmem:[%s2 + $0x258] sm:$0xff] %vm44, %v36
  %1676 = vst.msk [vmem:[%s2 + $0x270] sm:$0xff] %vm44, %v37
  %1677 = vst.msk [vmem:[%s2 + $0x288] sm:$0xff] %vm44, %v38
  %1678 = vst.msk [vmem:[%s2 + $0x2a0] sm:$0xff] %vm44, %v39
  %1679 = vst.msk [vmem:[%s2 + $0x2b8] sm:$0xff] %vm44, %v40
  %1680 = vst.msk [vmem:[%s2 + $0x2d0] sm:$0xff] %vm44, %v41
  %1681 = vst.msk [vmem:[%s2 + $0x2e8] sm:$0xff] %vm44, %v42
  %1714 = vrot.lane.b32.xlu0 %v1458, 3
  %v1715 = vpop.permute.xlu0 %1714
  %1716 = vrot.lane.b32.xlu0 %v1459, 3
  %v1717 = vpop.permute.xlu0 %1716
  %1718 = vrot.lane.b32.xlu0 %v1460, 3
  %v1719 = vpop.permute.xlu0 %1718
  %1720 = vrot.lane.b32.xlu0 %v1461, 3
  %v1721 = vpop.permute.xlu0 %1720
  %1722 = vrot.lane.b32.xlu0 %v1462, 3
  %v1723 = vpop.permute.xlu0 %1722
  %1724 = vrot.lane.b32.xlu0 %v1463, 3
  %v1725 = vpop.permute.xlu0 %1724
  %1726 = vrot.lane.b32.xlu0 %v1464, 3
  %v1727 = vpop.permute.xlu0 %1726
  %1728 = vrot.lane.b32.xlu0 %v1465, 3
  %v1729 = vpop.permute.xlu0 %1728
  %1730 = vrot.lane.b32.xlu0 %v1466, 3
  %v1731 = vpop.permute.xlu0 %1730
  %1732 = vrot.lane.b32.xlu0 %v1467, 3
  %v1733 = vpop.permute.xlu0 %1732
  %1734 = vrot.lane.b32.xlu0 %v1468, 3
  %v1735 = vpop.permute.xlu0 %1734
  %1736 = vrot.lane.b32.xlu0 %v1469, 3
  %v1737 = vpop.permute.xlu0 %1736
  %1738 = vrot.lane.b32.xlu0 %v1470, 3
  %v1739 = vpop.permute.xlu0 %1738
  %1740 = vrot.lane.b32.xlu0 %v1471, 3
  %v1741 = vpop.permute.xlu0 %1740
  %1742 = vrot.lane.b32.xlu0 %v1472, 3
  %v1743 = vpop.permute.xlu0 %1742
  %1744 = vrot.lane.b32.xlu0 %v1473, 3
  %v1745 = vpop.permute.xlu0 %1744
  %1746 = vrot.lane.b32.xlu0 %v1474, 3
  %v1747 = vpop.permute.xlu0 %1746
  %1748 = vrot.lane.b32.xlu0 %v1475, 3
  %v1749 = vpop.permute.xlu0 %1748
  %1750 = vrot.lane.b32.xlu0 %v1476, 3
  %v1751 = vpop.permute.xlu0 %1750
  %1752 = vrot.lane.b32.xlu0 %v1477, 3
  %v1753 = vpop.permute.xlu0 %1752
  %1754 = vrot.lane.b32.xlu0 %v1478, 3
  %v1755 = vpop.permute.xlu0 %1754
  %1756 = vrot.lane.b32.xlu0 %v1479, 3
  %v1757 = vpop.permute.xlu0 %1756
  %1758 = vrot.lane.b32.xlu0 %v1480, 3
  %v1759 = vpop.permute.xlu0 %1758
  %1760 = vrot.lane.b32.xlu0 %v1481, 3
  %v1761 = vpop.permute.xlu0 %1760
  %1762 = vrot.lane.b32.xlu0 %v1482, 3
  %v1763 = vpop.permute.xlu0 %1762
  %1764 = vrot.lane.b32.xlu0 %v1483, 3
  %v1765 = vpop.permute.xlu0 %1764
  %1766 = vrot.lane.b32.xlu0 %v1484, 3
  %v1767 = vpop.permute.xlu0 %1766
  %1768 = vrot.lane.b32.xlu0 %v1485, 3
  %v1769 = vpop.permute.xlu0 %1768
  %1770 = vrot.lane.b32.xlu0 %v1486, 3
  %v1771 = vpop.permute.xlu0 %1770
  %1772 = vrot.lane.b32.xlu0 %v1487, 3
  %v1773 = vpop.permute.xlu0 %1772
  %1774 = vrot.lane.b32.xlu0 %v1488, 3
  %v1775 = vpop.permute.xlu0 %1774
  %1776 = vrot.lane.b32.xlu0 %v1489, 3
  %v1777 = vpop.permute.xlu0 %1776
  %vm1810 = vcmask 1047576
  %1811 = vst.msk [vmem:[%s2] sm:$0xff] %vm1810, %v1715
  %1812 = vst.msk [vmem:[%s2 + $0x8] sm:$0xff] %vm44, %v1715
  %1813 = vst.msk [vmem:[%s2 + $0x18] sm:$0xff] %vm1810, %v1717
  %1814 = vst.msk [vmem:[%s2 + $0x20] sm:$0xff] %vm44, %v1717
  %1815 = vst.msk [vmem:[%s2 + $0x30] sm:$0xff] %vm1810, %v1719
  %1816 = vst.msk [vmem:[%s2 + $0x38] sm:$0xff] %vm44, %v1719
  %1817 = vst.msk [vmem:[%s2 + $0x48] sm:$0xff] %vm1810, %v1721
  %1818 = vst.msk [vmem:[%s2 + $0x50] sm:$0xff] %vm44, %v1721
  %1819 = vst.msk [vmem:[%s2 + $0x60] sm:$0xff] %vm1810, %v1723
  %1820 = vst.msk [vmem:[%s2 + $0x68] sm:$0xff] %vm44, %v1723
  %1821 = vst.msk [vmem:[%s2 + $0x78] sm:$0xff] %vm1810, %v1725
  %1822 = vst.msk [vmem:[%s2 + $0x80] sm:$0xff] %vm44, %v1725
  %1823 = vst.msk [vmem:[%s2 + $0x90] sm:$0xff] %vm1810, %v1727
  %1824 = vst.msk [vmem:[%s2 + $0x98] sm:$0xff] %vm44, %v1727
  %1825 = vst.msk [vmem:[%s2 + $0xa8] sm:$0xff] %vm1810, %v1729
  %1826 = vst.msk [vmem:[%s2 + $0xb0] sm:$0xff] %vm44, %v1729
  %1827 = vst.msk [vmem:[%s2 + $0xc0] sm:$0xff] %vm1810, %v1731
  %1828 = vst.msk [vmem:[%s2 + $0xc8] sm:$0xff] %vm44, %v1731
  %1829 = vst.msk [vmem:[%s2 + $0xd8] sm:$0xff] %vm1810, %v1733
  %1830 = vst.msk [vmem:[%s2 + $0xe0] sm:$0xff] %vm44, %v1733
  %1831 = vst.msk [vmem:[%s2 + $0xf0] sm:$0xff] %vm1810, %v1735
  %1832 = vst.msk [vmem:[%s2 + $0xf8] sm:$0xff] %vm44, %v1735
  %1833 = vst.msk [vmem:[%s2 + $0x108] sm:$0xff] %vm1810, %v1737
  %1834 = vst.msk [vmem:[%s2 + $0x110] sm:$0xff] %vm44, %v1737
  %1835 = vst.msk [vmem:[%s2 + $0x120] sm:$0xff] %vm1810, %v1739
  %1836 = vst.msk [vmem:[%s2 + $0x128] sm:$0xff] %vm44, %v1739
  %1837 = vst.msk [vmem:[%s2 + $0x138] sm:$0xff] %vm1810, %v1741
  %1838 = vst.msk [vmem:[%s2 + $0x140] sm:$0xff] %vm44, %v1741
  %1839 = vst.msk [vmem:[%s2 + $0x150] sm:$0xff] %vm1810, %v1743
  %1840 = vst.msk [vmem:[%s2 + $0x158] sm:$0xff] %vm44, %v1743
  %1841 = vst.msk [vmem:[%s2 + $0x168] sm:$0xff] %vm1810, %v1745
  %1842 = vst.msk [vmem:[%s2 + $0x170] sm:$0xff] %vm44, %v1745
  %1843 = vst.msk [vmem:[%s2 + $0x180] sm:$0xff] %vm1810, %v1747
  %1844 = vst.msk [vmem:[%s2 + $0x188] sm:$0xff] %vm44, %v1747
  %1845 = vst.msk [vmem:[%s2 + $0x198] sm:$0xff] %vm1810, %v1749
  %1846 = vst.msk [vmem:[%s2 + $0x1a0] sm:$0xff] %vm44, %v1749
  %1847 = vst.msk [vmem:[%s2 + $0x1b0] sm:$0xff] %vm1810, %v1751
  %1848 = vst.msk [vmem:[%s2 + $0x1b8] sm:$0xff] %vm44, %v1751
  %1849 = vst.msk [vmem:[%s2 + $0x1c8] sm:$0xff] %vm1810, %v1753
  %1850 = vst.msk [vmem:[%s2 + $0x1d0] sm:$0xff] %vm44, %v1753
  %1851 = vst.msk [vmem:[%s2 + $0x1e0] sm:$0xff] %vm1810, %v1755
  %1852 = vst.msk [vmem:[%s2 + $0x1e8] sm:$0xff] %vm44, %v1755
  %1853 = vst.msk [vmem:[%s2 + $0x1f8] sm:$0xff] %vm1810, %v1757
  %1854 = vst.msk [vmem:[%s2 + $0x200] sm:$0xff] %vm44, %v1757
  %1855 = vst.msk [vmem:[%s2 + $0x210] sm:$0xff] %vm1810, %v1759
  %1856 = vst.msk [vmem:[%s2 + $0x218] sm:$0xff] %vm44, %v1759
  %1857 = vst.msk [vmem:[%s2 + $0x228] sm:$0xff] %vm1810, %v1761
  %1858 = vst.msk [vmem:[%s2 + $0x230] sm:$0xff] %vm44, %v1761
  %1859 = vst.msk [vmem:[%s2 + $0x240] sm:$0xff] %vm1810, %v1763
  %1860 = vst.msk [vmem:[%s2 + $0x248] sm:$0xff] %vm44, %v1763
  %1861 = vst.msk [vmem:[%s2 + $0x258] sm:$0xff] %vm1810, %v1765
  %1862 = vst.msk [vmem:[%s2 + $0x260] sm:$0xff] %vm44, %v1765
  %1863 = vst.msk [vmem:[%s2 + $0x270] sm:$0xff] %vm1810, %v1767
  %1864 = vst.msk [vmem:[%s2 + $0x278] sm:$0xff] %vm44, %v1767
  %1865 = vst.msk [vmem:[%s2 + $0x288] sm:$0xff] %vm1810, %v1769
  %1866 = vst.msk [vmem:[%s2 + $0x290] sm:$0xff] %vm44, %v1769
  %1867 = vst.msk [vmem:[%s2 + $0x2a0] sm:$0xff] %vm1810, %v1771
  %1868 = vst.msk [vmem:[%s2 + $0x2a8] sm:$0xff] %vm44, %v1771
  %1869 = vst.msk [vmem:[%s2 + $0x2b8] sm:$0xff] %vm1810, %v1773
  %1870 = vst.msk [vmem:[%s2 + $0x2c0] sm:$0xff] %vm44, %v1773
  %1871 = vst.msk [vmem:[%s2 + $0x2d0] sm:$0xff] %vm1810, %v1775
  %1872 = vst.msk [vmem:[%s2 + $0x2d8] sm:$0xff] %vm44, %v1775
  %1873 = vst.msk [vmem:[%s2 + $0x2e8] sm:$0xff] %vm1810, %v1777
  %1874 = vst.msk [vmem:[%s2 + $0x2f0] sm:$0xff] %vm44, %v1777
  %1907 = vrot.lane.b32.xlu0 %v1618, 3
  %v1908 = vpop.permute.xlu0 %1907
  %1909 = vrot.lane.b32.xlu0 %v1619, 3
  %v1910 = vpop.permute.xlu0 %1909
  %1911 = vrot.lane.b32.xlu0 %v1620, 3
  %v1912 = vpop.permute.xlu0 %1911
  %1913 = vrot.lane.b32.xlu0 %v1621, 3
  %v1914 = vpop.permute.xlu0 %1913
  %1915 = vrot.lane.b32.xlu0 %v1622, 3
  %v1916 = vpop.permute.xlu0 %1915
  %1917 = vrot.lane.b32.xlu0 %v1623, 3
  %v1918 = vpop.permute.xlu0 %1917
  %1919 = vrot.lane.b32.xlu0 %v1624, 3
  %v1920 = vpop.permute.xlu0 %1919
  %1921 = vrot.lane.b32.xlu0 %v1625, 3
  %v1922 = vpop.permute.xlu0 %1921
  %1923 = vrot.lane.b32.xlu0 %v1626, 3
  %v1924 = vpop.permute.xlu0 %1923
  %1925 = vrot.lane.b32.xlu0 %v1627, 3
  %v1926 = vpop.permute.xlu0 %1925
  %1927 = vrot.lane.b32.xlu0 %v1628, 3
  %v1928 = vpop.permute.xlu0 %1927
  %1929 = vrot.lane.b32.xlu0 %v1629, 3
  %v1930 = vpop.permute.xlu0 %1929
  %1931 = vrot.lane.b32.xlu0 %v1630, 3
  %v1932 = vpop.permute.xlu0 %1931
  %1933 = vrot.lane.b32.xlu0 %v1631, 3
  %v1934 = vpop.permute.xlu0 %1933
  %1935 = vrot.lane.b32.xlu0 %v1632, 3
  %v1936 = vpop.permute.xlu0 %1935
  %1937 = vrot.lane.b32.xlu0 %v1633, 3
  %v1938 = vpop.permute.xlu0 %1937
  %1939 = vrot.lane.b32.xlu0 %v1634, 3
  %v1940 = vpop.permute.xlu0 %1939
  %1941 = vrot.lane.b32.xlu0 %v1635, 3
  %v1942 = vpop.permute.xlu0 %1941
  %1943 = vrot.lane.b32.xlu0 %v1636, 3
  %v1944 = vpop.permute.xlu0 %1943
  %1945 = vrot.lane.b32.xlu0 %v1637, 3
  %v1946 = vpop.permute.xlu0 %1945
  %1947 = vrot.lane.b32.xlu0 %v1638, 3
  %v1948 = vpop.permute.xlu0 %1947
  %1949 = vrot.lane.b32.xlu0 %v1639, 3
  %v1950 = vpop.permute.xlu0 %1949
  %1951 = vrot.lane.b32.xlu0 %v1640, 3
  %v1952 = vpop.permute.xlu0 %1951
  %1953 = vrot.lane.b32.xlu0 %v1641, 3
  %v1954 = vpop.permute.xlu0 %1953
  %1955 = vrot.lane.b32.xlu0 %v1642, 3
  %v1956 = vpop.permute.xlu0 %1955
  %1957 = vrot.lane.b32.xlu0 %v1643, 3
  %v1958 = vpop.permute.xlu0 %1957
  %1959 = vrot.lane.b32.xlu0 %v1644, 3
  %v1960 = vpop.permute.xlu0 %1959
  %1961 = vrot.lane.b32.xlu0 %v1645, 3
  %v1962 = vpop.permute.xlu0 %1961
  %1963 = vrot.lane.b32.xlu0 %v1646, 3
  %v1964 = vpop.permute.xlu0 %1963
  %1965 = vrot.lane.b32.xlu0 %v1647, 3
  %v1966 = vpop.permute.xlu0 %1965
  %1967 = vrot.lane.b32.xlu0 %v1648, 3
  %v1968 = vpop.permute.xlu0 %1967
  %1969 = vrot.lane.b32.xlu0 %v1649, 3
  %v1970 = vpop.permute.xlu0 %1969
  %2003 = vst.msk [vmem:[%s2 + $0x8] sm:$0xff] %vm1810, %v1908
  %2004 = vst.msk [vmem:[%s2 + $0x10] sm:$0xff] %vm44, %v1908
  %2005 = vst.msk [vmem:[%s2 + $0x20] sm:$0xff] %vm1810, %v1910
  %2006 = vst.msk [vmem:[%s2 + $0x28] sm:$0xff] %vm44, %v1910
  %2007 = vst.msk [vmem:[%s2 + $0x38] sm:$0xff] %vm1810, %v1912
  %2008 = vst.msk [vmem:[%s2 + $0x40] sm:$0xff] %vm44, %v1912
  %2009 = vst.msk [vmem:[%s2 + $0x50] sm:$0xff] %vm1810, %v1914
  %2010 = vst.msk [vmem:[%s2 + $0x58] sm:$0xff] %vm44, %v1914
  %2011 = vst.msk [vmem:[%s2 + $0x68] sm:$0xff] %vm1810, %v1916
  %2012 = vst.msk [vmem:[%s2 + $0x70] sm:$0xff] %vm44, %v1916
  %2013 = vst.msk [vmem:[%s2 + $0x80] sm:$0xff] %vm1810, %v1918
  %2014 = vst.msk [vmem:[%s2 + $0x88] sm:$0xff] %vm44, %v1918
  %2015 = vst.msk [vmem:[%s2 + $0x98] sm:$0xff] %vm1810, %v1920
  %2016 = vst.msk [vmem:[%s2 + $0xa0] sm:$0xff] %vm44, %v1920
  %2017 = vst.msk [vmem:[%s2 + $0xb0] sm:$0xff] %vm1810, %v1922
  %2018 = vst.msk [vmem:[%s2 + $0xb8] sm:$0xff] %vm44, %v1922
  %2019 = vst.msk [vmem:[%s2 + $0xc8] sm:$0xff] %vm1810, %v1924
  %2020 = vst.msk [vmem:[%s2 + $0xd0] sm:$0xff] %vm44, %v1924
  %2021 = vst.msk [vmem:[%s2 + $0xe0] sm:$0xff] %vm1810, %v1926
  %2022 = vst.msk [vmem:[%s2 + $0xe8] sm:$0xff] %vm44, %v1926
  %2023 = vst.msk [vmem:[%s2 + $0xf8] sm:$0xff] %vm1810, %v1928
  %2024 = vst.msk [vmem:[%s2 + $0x100] sm:$0xff] %vm44, %v1928
  %2025 = vst.msk [vmem:[%s2 + $0x110] sm:$0xff] %vm1810, %v1930
  %2026 = vst.msk [vmem:[%s2 + $0x118] sm:$0xff] %vm44, %v1930
  %2027 = vst.msk [vmem:[%s2 + $0x128] sm:$0xff] %vm1810, %v1932
  %2028 = vst.msk [vmem:[%s2 + $0x130] sm:$0xff] %vm44, %v1932
  %2029 = vst.msk [vmem:[%s2 + $0x140] sm:$0xff] %vm1810, %v1934
  %2030 = vst.msk [vmem:[%s2 + $0x148] sm:$0xff] %vm44, %v1934
  %2031 = vst.msk [vmem:[%s2 + $0x158] sm:$0xff] %vm1810, %v1936
  %2032 = vst.msk [vmem:[%s2 + $0x160] sm:$0xff] %vm44, %v1936
  %2033 = vst.msk [vmem:[%s2 + $0x170] sm:$0xff] %vm1810, %v1938
  %2034 = vst.msk [vmem:[%s2 + $0x178] sm:$0xff] %vm44, %v1938
  %2035 = vst.msk [vmem:[%s2 + $0x188] sm:$0xff] %vm1810, %v1940
  %2036 = vst.msk [vmem:[%s2 + $0x190] sm:$0xff] %vm44, %v1940
  %2037 = vst.msk [vmem:[%s2 + $0x1a0] sm:$0xff] %vm1810, %v1942
  %2038 = vst.msk [vmem:[%s2 + $0x1a8] sm:$0xff] %vm44, %v1942
  %2039 = vst.msk [vmem:[%s2 + $0x1b8] sm:$0xff] %vm1810, %v1944
  %2040 = vst.msk [vmem:[%s2 + $0x1c0] sm:$0xff] %vm44, %v1944
  %2041 = vst.msk [vmem:[%s2 + $0x1d0] sm:$0xff] %vm1810, %v1946
  %2042 = vst.msk [vmem:[%s2 + $0x1d8] sm:$0xff] %vm44, %v1946
  %2043 = vst.msk [vmem:[%s2 + $0x1e8] sm:$0xff] %vm1810, %v1948
  %2044 = vst.msk [vmem:[%s2 + $0x1f0] sm:$0xff] %vm44, %v1948
  %2045 = vst.msk [vmem:[%s2 + $0x200] sm:$0xff] %vm1810, %v1950
  %2046 = vst.msk [vmem:[%s2 + $0x208] sm:$0xff] %vm44, %v1950
  %2047 = vst.msk [vmem:[%s2 + $0x218] sm:$0xff] %vm1810, %v1952
  %2048 = vst.msk [vmem:[%s2 + $0x220] sm:$0xff] %vm44, %v1952
  %2049 = vst.msk [vmem:[%s2 + $0x230] sm:$0xff] %vm1810, %v1954
  %2050 = vst.msk [vmem:[%s2 + $0x238] sm:$0xff] %vm44, %v1954
  %2051 = vst.msk [vmem:[%s2 + $0x248] sm:$0xff] %vm1810, %v1956
  %2052 = vst.msk [vmem:[%s2 + $0x250] sm:$0xff] %vm44, %v1956
  %2053 = vst.msk [vmem:[%s2 + $0x260] sm:$0xff] %vm1810, %v1958
  %2054 = vst.msk [vmem:[%s2 + $0x268] sm:$0xff] %vm44, %v1958
  %2055 = vst.msk [vmem:[%s2 + $0x278] sm:$0xff] %vm1810, %v1960
  %2056 = vst.msk [vmem:[%s2 + $0x280] sm:$0xff] %vm44, %v1960
  %2057 = vst.msk [vmem:[%s2 + $0x290] sm:$0xff] %vm1810, %v1962
  %2058 = vst.msk [vmem:[%s2 + $0x298] sm:$0xff] %vm44, %v1962
  %2059 = vst.msk [vmem:[%s2 + $0x2a8] sm:$0xff] %vm1810, %v1964
  %2060 = vst.msk [vmem:[%s2 + $0x2b0] sm:$0xff] %vm44, %v1964
  %2061 = vst.msk [vmem:[%s2 + $0x2c0] sm:$0xff] %vm1810, %v1966
  %2062 = vst.msk [vmem:[%s2 + $0x2c8] sm:$0xff] %vm44, %v1966
  %2063 = vst.msk [vmem:[%s2 + $0x2d8] sm:$0xff] %vm1810, %v1968
  %2064 = vst.msk [vmem:[%s2 + $0x2e0] sm:$0xff] %vm44, %v1968
  %2065 = vst.msk [vmem:[%s2 + $0x2f0] sm:$0xff] %vm1810, %v1970
  %2066 = vst.msk [vmem:[%s2 + $0x2f8] sm:$0xff] %vm44, %v1970
  // Predicated region
  $region10: #{tpu_custom_call.1} parent=0 // pred_check
    _
  $region11: #{tpu_custom_call.1} parent=0 // pred_check_branch
    %2068 = sbr.rel (0) target = $region13
  $region12: #{tpu_custom_call.1} parent=0 // pred_region
    _
  $region13: #{tpu_custom_call.1} parent=0 // pred_fallthru
    _
  // Predicated region
  $region14: #{tpu_custom_call.1} parent=0 // pred_check
    _
  $region15: #{tpu_custom_call.1} parent=0 // pred_check_branch
    %2070 = sbr.rel (0) target = $region17
  $region16: #{tpu_custom_call.1} parent=0 // pred_region
    _
  $region17: #{tpu_custom_call.1} parent=0 // pred_fallthru
    _

</llo_original>
